<compile_context>
chip_gen: v7x
topology: tpu7x:2x2x1
jax: 0.10.0
libtpu: 0.0.40
codegen_flags: <defaults>
</compile_context>

<pallas_src>
import functools
import math

import jax
import jax.numpy as jnp
from jax.experimental import pallas as pl
from jax.experimental.pallas import tpu as pltpu

SIGMA = 1.0  # Gaussian RBF width used by the (unspecified) `Kernel` object.


def _kgf_kernel(pos_rows_ref, pos_cols_ref, wt_ref, wlin_ref, bias_ref,
                out_ref, s_scr, *, filter_taps, normalize, sigma, n_dims,
                k_pts, n_slice, r_slices, w_out, mm_dtype):
    # Per grid step (R independent slices of N = G*K points each):
    #   pos_rows_ref : (D*K, R*N)      row d*K+k, lane g*K+j  ->  pos[d] of point (g,k)
    #   pos_cols_ref : (D,   R*N)      pos[d] of the lane's own point
    #   wt_ref       : (Win, R*N)      transposed input weights
    #   wlin_ref     : (T1*Wout, Win)  stacked per-tap linear weights (row t*Wout+o)
    #   bias_ref     : (Wout, 1)
    #   out_ref      : (Wout, R*N)     transposed output weights (lane-dense store)
    #   s_scr        : (N, N) mm_dtype persistent block-diagonal GSO scratch
    K = k_pts
    N = n_slice
    G = N // K
    inv_two_sigma_sq = 1.0 / (2.0 * sigma * sigma)

    # Re-zero the GSO scratch once per grid step: off-diagonal KxK blocks stay
    # zero, diagonal blocks are fully overwritten below for every slice.  This
    # is ~32 bf16 vreg stores and needs no program_id==0 gate, so it is correct
    # under any megacore/"parallel" sharding of the grid.
    s_scr[...] = jnp.zeros(s_scr.shape, s_scr.dtype)

    wlin = wlin_ref[...].astype(jnp.float32)          # (T1*Wout, Win)
    bias = bias_ref[...].astype(jnp.float32)          # (Wout, 1)

    for r in range(r_slices):                         # static unroll, R small
        base = r * N

        # ---- packed block-diagonal RBF strip: strip[k, g*K+j] = S_g[k, j] ----
        d2 = None
        for d in range(n_dims):                       # VPU only, 4 vregs/dim
            rows = pos_rows_ref[d * K:(d + 1) * K, base:base + N].astype(jnp.float32)
            col = pos_cols_ref[d:d + 1, base:base + N].astype(jnp.float32)
            diff = rows - col
            d2 = diff * diff if d2 is None else d2 + diff * diff
        strip = jnp.exp(-d2 * inv_two_sigma_sq)       # (K, N) f32: 4 vregs of exp

        if normalize:
            # degree[n] = sum_k S_g[k, j] (== row degree by symmetry)
            deg = jnp.sum(strip, axis=0, keepdims=True)          # (1, N)
            rs = jax.lax.rsqrt(deg)                              # (1, N)

        # Scatter the KxK diagonal blocks into the persistent GSO scratch.
        # Source/dest share the same lane offset and dest rows are bf16
        # row-tile aligned -> plain masked stores, no cross-lane shuffles.
        strip_mm = strip.astype(mm_dtype)
        for g in range(G):
            s_scr[g * K:(g + 1) * K, g * K:(g + 1) * K] = strip_mm[:, g * K:(g + 1) * K]
        # TODO(synk): drive the MXU explicitly (pltpu.matmul_push_rhs once per
        #             slice, matmul_acc_lhs per tap) so S stays stationary
        #             across the T hops instead of being re-loaded per matmul.

        # ---- fused per-tap linear + Horner over the graph-filter hops ----
        x0 = wt_ref[:, base:base + N].astype(jnp.float32)          # (Win, N)
        # P[t*Wout + o, :] = (W_t @ x0)[o, :]; one matmul instead of T+1 tiny ones.
        P = jnp.dot(wlin, x0, preferred_element_type=jnp.float32)  # (T1*Wout, N)

        acc = P[filter_taps * w_out:(filter_taps + 1) * w_out, :]  # (Wout, N)
        for t in range(filter_taps - 1, -1, -1):
            h = acc * rs if normalize else acc
            h = jnp.dot(h.astype(mm_dtype), s_scr[...],
                        preferred_element_type=jnp.float32)        # (Wout, N)
            if normalize:
                h = h * rs
            acc = h + P[t * w_out:(t + 1) * w_out, :]

        out_ref[:, base:base + N] = (acc + bias).astype(out_ref.dtype)


def kernel_graph_filter(positions, weights, lin_weight, lin_bias, *,
                        filter_taps, normalize=True, sigma=SIGMA,
                        pairs_per_block=16, slices_per_step=4,
                        matmul_dtype=jnp.bfloat16):
    """positions: (B, C, K, D), weights: (B, C, K, Win) -> (B, C, K, Wout)."""
    B, C, K, D = positions.shape
    Win = weights.shape[-1]
    Wout = lin_bias.shape[0]
    T1 = filter_taps + 1
    BC = B * C

    # Pairs per slice so N = G*K is a multiple of 128 (lane-dense, (8,128)-clean).
    unit = 128 // math.gcd(K, 128)
    G = max(unit, ((pairs_per_block + unit - 1) // unit) * unit)
    N = G * K
    # Independent slices fused per grid step (amortizes per-step overhead),
    # clipped so tiny problems are not over-padded.
    R = max(1, min(slices_per_step, -(-BC // G)))
    step_pairs = R * G
    BCpad = -(-BC // step_pairs) * step_pairs
    nblk = BCpad // step_pairs
    Np = BCpad * K

    pos2 = positions.reshape(BC, K, D)
    w2 = weights.reshape(BC, K, Win)
    if BCpad != BC:
        pad = BCpad - BC
        # Zero padding is safe: padded pairs give S == 1, degree == K, and their
        # outputs are sliced away before returning.
        pos2 = jnp.concatenate([pos2, jnp.zeros((pad, K, D), pos2.dtype)], axis=0)
        w2 = jnp.concatenate([w2, jnp.zeros((pad, K, Win), w2.dtype)], axis=0)

    # Lane layout: n = pair*K + j.  "cols" are each lane's own position;
    # "rows" are the within-block broadcast pos[d] of point (pair, k), row d*K+k.
    pos_cols = jnp.transpose(pos2.reshape(Np, D))                       # (D, Np)
    prd = jnp.transpose(pos2, (2, 1, 0))                                # (D, K, BCpad)
    pos_rows = jnp.broadcast_to(prd[..., None],
                                (D, K, BCpad, K)).reshape(D * K, Np)    # (D*K, Np)
    w_t = jnp.transpose(w2.reshape(Np, Win))                            # (Win, Np)

    # PyTorch: stack(xs, dim=4).reshape -> feature index f = w*(T+1) + t.
    # Stack per-tap (Wout, Win) slices along rows: row index t*Wout + o.
    wlin_stacked = lin_weight.reshape(Wout, Win, T1).transpose(2, 0, 1).reshape(T1 * Wout, Win)
    bias = lin_bias.reshape(Wout, 1)

    kern = functools.partial(_kgf_kernel, filter_taps=filter_taps,
                             normalize=normalize, sigma=sigma, n_dims=D,
                             k_pts=K, n_slice=N, r_slices=R, w_out=Wout,
                             mm_dtype=matmul_dtype)

    slices_total = nblk * R
    flops_per_slice = (3 * D * K * N                       # strip diffs / squares
                       + 6 * K * N                         # exp scale, degree, scatter
                       + 2 * T1 * Wout * Win * N           # fused per-tap linear
                       + filter_taps * (2 * Wout * N * N + 4 * Wout * N))  # hops
    cost = pl.CostEstimate(
        flops=int(slices_total * flops_per_slice),
        transcendentals=int(slices_total * (K * N + N)),
        bytes_accessed=int(4 * (pos_rows.size + pos_cols.size + w_t.size
                                + wlin_stacked.size + bias.size + Wout * Np)),
    )

    out_t = pl.pallas_call(
        kern,
        out_shape=jax.ShapeDtypeStruct((Wout, Np), weights.dtype),
        grid_spec=pltpu.PrefetchScalarGridSpec(
            num_scalar_prefetch=0,
            grid=(nblk,),
            in_specs=[
                pl.BlockSpec((D * K, R * N), lambda s: (0, s)),
                pl.BlockSpec((D, R * N), lambda s: (0, s)),
                pl.BlockSpec((Win, R * N), lambda s: (0, s)),
                pl.BlockSpec((T1 * Wout, Win), lambda s: (0, 0)),   # constant
                pl.BlockSpec((Wout, 1), lambda s: (0, 0)),          # constant
            ],
            out_specs=pl.BlockSpec((Wout, R * N), lambda s: (0, s)),
            scratch_shapes=[pltpu.VMEM((N, N), matmul_dtype)],      # block-diag GSO
        ),
        compiler_params=pltpu.CompilerParams(
            # TODO(synk): use CORE_PARALLEL / core_map for an explicit 2-TC split
            #             on v7x (plain "parallel" is a near no-op but portable).
            dimension_semantics=("parallel",)),
        cost_estimate=cost,
    )(pos_rows, pos_cols, w_t, wlin_stacked, bias)

    out = jnp.transpose(out_t).reshape(BCpad, K, Wout)[:BC]
    return out.reshape(B, C, K, Wout)


def reference(positions, weights, lin_weight, lin_bias, *,
              filter_taps, normalize=True, sigma=SIGMA):
    """Plain-JAX replica of the PyTorch forward (for verification)."""
    diff = positions[..., :, None, :] - positions[..., None, :, :]
    S = jnp.exp(-jnp.sum(diff * diff, axis=-1) / (2.0 * sigma * sigma))
    xs = [weights]
    for _ in range(filter_taps):
        if normalize:
            ds = jnp.sqrt(jnp.sum(S, axis=3, keepdims=True))
            x = (S @ (xs[-1] / ds)) / ds
        else:
            x = S @ xs[-1]
        xs.append(x)
    feat = jnp.stack(xs, axis=4).reshape(
        *weights.shape[:3], (filter_taps + 1) * weights.shape[3])
    return feat @ lin_weight.T + lin_bias


if __name__ == "__main__":
    # Small shapes; B*C = 21 exercises padding (21 -> 32 pairs) and the R loop.
    B, C, K, D = 3, 7, 16, 3        # batch, channels, in_kernels, n_dimensions
    Win, Wout, filter_taps = 4, 8, 2

    key = jax.random.PRNGKey(0)
    k1, k2, k3, k4 = jax.random.split(key, 4)
    positions = jax.random.normal(k1, (B, C, K, D), jnp.float32)
    weights = jax.random.normal(k2, (B, C, K, Win), jnp.float32)

    # Deterministic nn.Linear-style init: U(-1/sqrt(fan_in), 1/sqrt(fan_in))
    fan_in = (filter_taps + 1) * Win
    bound = 1.0 / (fan_in ** 0.5)
    lin_weight = jax.random.uniform(k3, (Wout, fan_in), jnp.float32, -bound, bound)
    lin_bias = jax.random.uniform(k4, (Wout,), jnp.float32, -bound, bound)

    ref_n = reference(positions, weights, lin_weight, lin_bias,
                      filter_taps=filter_taps, normalize=True)
    ref_u = reference(positions, weights, lin_weight, lin_bias,
                      filter_taps=filter_taps, normalize=False)

    def check(out, ref, tag):
        assert out.shape == ref.shape, f"{tag}: shape {out.shape} vs {ref.shape}"
        # Tolerance sized for bf16 MXU operands (~2^-8 relative per hop, per review).
        err = float(jnp.max(jnp.abs(out - ref)))
        assert jnp.allclose(out, ref, atol=2e-2, rtol=5e-2), f"{tag}: max abs err {err}"

    # Default: R=2 slices fused into a single grid step (padding + inner loop).
    fwd = jax.jit(functools.partial(kernel_graph_filter,
                                    filter_taps=filter_taps, normalize=True))
    out = jax.block_until_ready(fwd(positions, weights, lin_weight, lin_bias))
    check(out, ref_n, "normalized/R=2")

    # One slice per step -> 2-step grid: exercises the per-step scratch re-zero
    # and the "parallel" grid path.
    fwd1 = jax.jit(functools.partial(kernel_graph_filter, filter_taps=filter_taps,
                                     normalize=True, slices_per_step=1))
    out1 = jax.block_until_ready(fwd1(positions, weights, lin_weight, lin_bias))
    check(out1, ref_n, "normalized/R=1")

    # Unnormalized-GSO path.
    fwd_u = jax.jit(functools.partial(kernel_graph_filter,
                                      filter_taps=filter_taps, normalize=False))
    out_u = jax.block_until_ready(fwd_u(positions, weights, lin_weight, lin_bias))
    check(out_u, ref_u, "unnormalized")

    print("KERNEL_OK")
</pallas_src>

<mosaic_0001>
module attributes {stable_mosaic.version = 11 : i64} {
  func.func @_kgf_kernel(%arg0: i32, %arg1: memref<48x512xf32, #tpu.memory_space<vmem>>, %arg2: memref<3x512xf32, #tpu.memory_space<vmem>>, %arg3: memref<4x512xf32, #tpu.memory_space<vmem>>, %arg4: memref<24x4xf32, #tpu.memory_space<vmem>>, %arg5: memref<8x1xf32, #tpu.memory_space<vmem>>, %arg6: memref<8x512xf32, #tpu.memory_space<vmem>>, %arg7: memref<256x256xbf16, #tpu.memory_space<vmem>>) attributes {dimension_semantics = [#tpu.dimension_semantics<parallel>], iteration_bounds = array<i64: 1>, scalar_prefetch = 0 : i64, scratch_operands = 1 : i64, tpu.core_type = #tpu.core_type<tc>, window_params = [{transform_indices = @transform_0, window_bounds = array<i64: 48, 512>}, {transform_indices = @transform_1, window_bounds = array<i64: 3, 512>}, {transform_indices = @transform_2, window_bounds = array<i64: 4, 512>}, {pipeline_mode = #tpu.pipeline_mode<synchronous>, transform_indices = @transform_3, window_bounds = array<i64: 24, 4>}, {pipeline_mode = #tpu.pipeline_mode<synchronous>, transform_indices = @transform_4, window_bounds = array<i64: 8, 1>}, {transform_indices = @transform_5, window_bounds = array<i64: 8, 512>}]} {
    %cst = arith.constant 0.000000e+00 : bf16
    %0 = vector.broadcast %cst : bf16 to vector<256x256xbf16>
    %c0 = arith.constant 0 : index
    %c0_0 = arith.constant 0 : index
    %1 = vector.load %arg7[%c0, %c0_0] : memref<256x256xbf16, #tpu.memory_space<vmem>>, vector<256x256xbf16>
    tpu.vector_store %arg7[%c0, %c0_0], %0 {strides = array<i32>} : memref<256x256xbf16, #tpu.memory_space<vmem>>, vector<256x256xbf16>,
    %c0_1 = arith.constant 0 : index
    %c0_2 = arith.constant 0 : index
    %2 = vector.load %arg4[%c0_1, %c0_2] : memref<24x4xf32, #tpu.memory_space<vmem>>, vector<24x4xf32>
    %c0_3 = arith.constant 0 : index
    %c0_4 = arith.constant 0 : index
    %3 = vector.load %arg5[%c0_3, %c0_4] : memref<8x1xf32, #tpu.memory_space<vmem>>, vector<8x1xf32>
    %c0_5 = arith.constant 0 : index
    %c0_6 = arith.constant 0 : index
    %4 = vector.load %arg1[%c0_5, %c0_6] : memref<48x512xf32, #tpu.memory_space<vmem>>, vector<16x256xf32>
    %c0_7 = arith.constant 0 : index
    %c0_8 = arith.constant 0 : index
    %5 = vector.load %arg2[%c0_7, %c0_8] : memref<3x512xf32, #tpu.memory_space<vmem>>, vector<1x256xf32>
    %6 = vector.broadcast %5 : vector<1x256xf32> to vector<16x256xf32>
    %7 = arith.subf %4, %6 : vector<16x256xf32>
    %8 = arith.mulf %7, %7 : vector<16x256xf32>
    %c16 = arith.constant 16 : index
    %c0_9 = arith.constant 0 : index
    %9 = vector.load %arg1[%c16, %c0_9] : memref<48x512xf32, #tpu.memory_space<vmem>>, vector<16x256xf32>
    %c1 = arith.constant 1 : index
    %c0_10 = arith.constant 0 : index
    %10 = vector.load %arg2[%c1, %c0_10] : memref<3x512xf32, #tpu.memory_space<vmem>>, vector<1x256xf32>
    %11 = vector.broadcast %10 : vector<1x256xf32> to vector<16x256xf32>
    %12 = arith.subf %9, %11 : vector<16x256xf32>
    %13 = arith.mulf %12, %12 : vector<16x256xf32>
    %14 = arith.addf %8, %13 : vector<16x256xf32>
    %c32 = arith.constant 32 : index
    %c0_11 = arith.constant 0 : index
    %15 = vector.load %arg1[%c32, %c0_11] : memref<48x512xf32, #tpu.memory_space<vmem>>, vector<16x256xf32>
    %c2 = arith.constant 2 : index
    %c0_12 = arith.constant 0 : index
    %16 = vector.load %arg2[%c2, %c0_12] : memref<3x512xf32, #tpu.memory_space<vmem>>, vector<1x256xf32>
    %17 = vector.broadcast %16 : vector<1x256xf32> to vector<16x256xf32>
    %18 = arith.subf %15, %17 : vector<16x256xf32>
    %19 = arith.mulf %18, %18 : vector<16x256xf32>
    %20 = arith.addf %14, %19 : vector<16x256xf32>
    %cst_13 = arith.constant 0.000000e+00 : f32
    %21 = vector.broadcast %cst_13 : f32 to vector<16x256xf32>
    %22 = arith.subf %21, %20 : vector<16x256xf32>
    %cst_14 = arith.constant 5.000000e-01 : f32
    %23 = vector.broadcast %cst_14 : f32 to vector<16x256xf32>
    %24 = arith.mulf %22, %23 : vector<16x256xf32>
    %25 = math.exp %24 : vector<16x256xf32>
    %cst_15 = arith.constant dense<0.000000e+00> : vector<256xf32>
    %26 = vector.multi_reduction <add>, %25, %cst_15 [0] : vector<16x256xf32> to vector<256xf32>
    %27 = vector.shape_cast %26 : vector<256xf32> to vector<1x256xf32>
    %28 = math.rsqrt %27 : vector<1x256xf32>
    %29 = arith.truncf %25 : vector<16x256xf32> to vector<16x256xbf16>
    %30 = vector.extract_strided_slice %29 {offsets = [0, 0], sizes = [16, 16], strides = [1, 1]} : vector<16x256xbf16> to vector<16x16xbf16>
    %c0_16 = arith.constant 0 : index
    %c0_17 = arith.constant 0 : index
    %31 = vector.load %arg7[%c0_16, %c0_17] : memref<256x256xbf16, #tpu.memory_space<vmem>>, vector<16x16xbf16>
    tpu.vector_store %arg7[%c0_16, %c0_17], %30 {strides = array<i32>} : memref<256x256xbf16, #tpu.memory_space<vmem>>, vector<16x16xbf16>,
    %32 = vector.extract_strided_slice %29 {offsets = [0, 16], sizes = [16, 16], strides = [1, 1]} : vector<16x256xbf16> to vector<16x16xbf16>
    %c16_18 = arith.constant 16 : index
    %c16_19 = arith.constant 16 : index
    %33 = vector.load %arg7[%c16_18, %c16_19] : memref<256x256xbf16, #tpu.memory_space<vmem>>, vector<16x16xbf16>
    tpu.vector_store %arg7[%c16_18, %c16_19], %32 {strides = array<i32>} : memref<256x256xbf16, #tpu.memory_space<vmem>>, vector<16x16xbf16>,
    %34 = vector.extract_strided_slice %29 {offsets = [0, 32], sizes = [16, 16], strides = [1, 1]} : vector<16x256xbf16> to vector<16x16xbf16>
    %c32_20 = arith.constant 32 : index
    %c32_21 = arith.constant 32 : index
    %35 = vector.load %arg7[%c32_20, %c32_21] : memref<256x256xbf16, #tpu.memory_space<vmem>>, vector<16x16xbf16>
    tpu.vector_store %arg7[%c32_20, %c32_21], %34 {strides = array<i32>} : memref<256x256xbf16, #tpu.memory_space<vmem>>, vector<16x16xbf16>,
    %36 = vector.extract_strided_slice %29 {offsets = [0, 48], sizes = [16, 16], strides = [1, 1]} : vector<16x256xbf16> to vector<16x16xbf16>
    %c48 = arith.constant 48 : index
    %c48_22 = arith.constant 48 : index
    %37 = vector.load %arg7[%c48, %c48_22] : memref<256x256xbf16, #tpu.memory_space<vmem>>, vector<16x16xbf16>
    tpu.vector_store %arg7[%c48, %c48_22], %36 {strides = array<i32>} : memref<256x256xbf16, #tpu.memory_space<vmem>>, vector<16x16xbf16>,
    %38 = vector.extract_strided_slice %29 {offsets = [0, 64], sizes = [16, 16], strides = [1, 1]} : vector<16x256xbf16> to vector<16x16xbf16>
    %c64 = arith.constant 64 : index
    %c64_23 = arith.constant 64 : index
    %39 = vector.load %arg7[%c64, %c64_23] : memref<256x256xbf16, #tpu.memory_space<vmem>>, vector<16x16xbf16>
    tpu.vector_store %arg7[%c64, %c64_23], %38 {strides = array<i32>} : memref<256x256xbf16, #tpu.memory_space<vmem>>, vector<16x16xbf16>,
    %40 = vector.extract_strided_slice %29 {offsets = [0, 80], sizes = [16, 16], strides = [1, 1]} : vector<16x256xbf16> to vector<16x16xbf16>
    %c80 = arith.constant 80 : index
    %c80_24 = arith.constant 80 : index
    %41 = vector.load %arg7[%c80, %c80_24] : memref<256x256xbf16, #tpu.memory_space<vmem>>, vector<16x16xbf16>
    tpu.vector_store %arg7[%c80, %c80_24], %40 {strides = array<i32>} : memref<256x256xbf16, #tpu.memory_space<vmem>>, vector<16x16xbf16>,
    %42 = vector.extract_strided_slice %29 {offsets = [0, 96], sizes = [16, 16], strides = [1, 1]} : vector<16x256xbf16> to vector<16x16xbf16>
    %c96 = arith.constant 96 : index
    %c96_25 = arith.constant 96 : index
    %43 = vector.load %arg7[%c96, %c96_25] : memref<256x256xbf16, #tpu.memory_space<vmem>>, vector<16x16xbf16>
    tpu.vector_store %arg7[%c96, %c96_25], %42 {strides = array<i32>} : memref<256x256xbf16, #tpu.memory_space<vmem>>, vector<16x16xbf16>,
    %44 = vector.extract_strided_slice %29 {offsets = [0, 112], sizes = [16, 16], strides = [1, 1]} : vector<16x256xbf16> to vector<16x16xbf16>
    %c112 = arith.constant 112 : index
    %c112_26 = arith.constant 112 : index
    %45 = vector.load %arg7[%c112, %c112_26] : memref<256x256xbf16, #tpu.memory_space<vmem>>, vector<16x16xbf16>
    tpu.vector_store %arg7[%c112, %c112_26], %44 {strides = array<i32>} : memref<256x256xbf16, #tpu.memory_space<vmem>>, vector<16x16xbf16>,
    %46 = vector.extract_strided_slice %29 {offsets = [0, 128], sizes = [16, 16], strides = [1, 1]} : vector<16x256xbf16> to vector<16x16xbf16>
    %c128 = arith.constant 128 : index
    %c128_27 = arith.constant 128 : index
    %47 = vector.load %arg7[%c128, %c128_27] : memref<256x256xbf16, #tpu.memory_space<vmem>>, vector<16x16xbf16>
    tpu.vector_store %arg7[%c128, %c128_27], %46 {strides = array<i32>} : memref<256x256xbf16, #tpu.memory_space<vmem>>, vector<16x16xbf16>,
    %48 = vector.extract_strided_slice %29 {offsets = [0, 144], sizes = [16, 16], strides = [1, 1]} : vector<16x256xbf16> to vector<16x16xbf16>
    %c144 = arith.constant 144 : index
    %c144_28 = arith.constant 144 : index
    %49 = vector.load %arg7[%c144, %c144_28] : memref<256x256xbf16, #tpu.memory_space<vmem>>, vector<16x16xbf16>
    tpu.vector_store %arg7[%c144, %c144_28], %48 {strides = array<i32>} : memref<256x256xbf16, #tpu.memory_space<vmem>>, vector<16x16xbf16>,
    %50 = vector.extract_strided_slice %29 {offsets = [0, 160], sizes = [16, 16], strides = [1, 1]} : vector<16x256xbf16> to vector<16x16xbf16>
    %c160 = arith.constant 160 : index
    %c160_29 = arith.constant 160 : index
    %51 = vector.load %arg7[%c160, %c160_29] : memref<256x256xbf16, #tpu.memory_space<vmem>>, vector<16x16xbf16>
    tpu.vector_store %arg7[%c160, %c160_29], %50 {strides = array<i32>} : memref<256x256xbf16, #tpu.memory_space<vmem>>, vector<16x16xbf16>,
    %52 = vector.extract_strided_slice %29 {offsets = [0, 176], sizes = [16, 16], strides = [1, 1]} : vector<16x256xbf16> to vector<16x16xbf16>
    %c176 = arith.constant 176 : index
    %c176_30 = arith.constant 176 : index
    %53 = vector.load %arg7[%c176, %c176_30] : memref<256x256xbf16, #tpu.memory_space<vmem>>, vector<16x16xbf16>
    tpu.vector_store %arg7[%c176, %c176_30], %52 {strides = array<i32>} : memref<256x256xbf16, #tpu.memory_space<vmem>>, vector<16x16xbf16>,
    %54 = vector.extract_strided_slice %29 {offsets = [0, 192], sizes = [16, 16], strides = [1, 1]} : vector<16x256xbf16> to vector<16x16xbf16>
    %c192 = arith.constant 192 : index
    %c192_31 = arith.constant 192 : index
    %55 = vector.load %arg7[%c192, %c192_31] : memref<256x256xbf16, #tpu.memory_space<vmem>>, vector<16x16xbf16>
    tpu.vector_store %arg7[%c192, %c192_31], %54 {strides = array<i32>} : memref<256x256xbf16, #tpu.memory_space<vmem>>, vector<16x16xbf16>,
    %56 = vector.extract_strided_slice %29 {offsets = [0, 208], sizes = [16, 16], strides = [1, 1]} : vector<16x256xbf16> to vector<16x16xbf16>
    %c208 = arith.constant 208 : index
    %c208_32 = arith.constant 208 : index
    %57 = vector.load %arg7[%c208, %c208_32] : memref<256x256xbf16, #tpu.memory_space<vmem>>, vector<16x16xbf16>
    tpu.vector_store %arg7[%c208, %c208_32], %56 {strides = array<i32>} : memref<256x256xbf16, #tpu.memory_space<vmem>>, vector<16x16xbf16>,
    %58 = vector.extract_strided_slice %29 {offsets = [0, 224], sizes = [16, 16], strides = [1, 1]} : vector<16x256xbf16> to vector<16x16xbf16>
    %c224 = arith.constant 224 : index
    %c224_33 = arith.constant 224 : index
    %59 = vector.load %arg7[%c224, %c224_33] : memref<256x256xbf16, #tpu.memory_space<vmem>>, vector<16x16xbf16>
    tpu.vector_store %arg7[%c224, %c224_33], %58 {strides = array<i32>} : memref<256x256xbf16, #tpu.memory_space<vmem>>, vector<16x16xbf16>,
    %60 = vector.extract_strided_slice %29 {offsets = [0, 240], sizes = [16, 16], strides = [1, 1]} : vector<16x256xbf16> to vector<16x16xbf16>
    %c240 = arith.constant 240 : index
    %c240_34 = arith.constant 240 : index
    %61 = vector.load %arg7[%c240, %c240_34] : memref<256x256xbf16, #tpu.memory_space<vmem>>, vector<16x16xbf16>
    tpu.vector_store %arg7[%c240, %c240_34], %60 {strides = array<i32>} : memref<256x256xbf16, #tpu.memory_space<vmem>>, vector<16x16xbf16>,
    %c0_35 = arith.constant 0 : index
    %c0_36 = arith.constant 0 : index
    %62 = vector.load %arg3[%c0_35, %c0_36] : memref<4x512xf32, #tpu.memory_space<vmem>>, vector<4x256xf32>
    %cst_37 = arith.constant dense<0.000000e+00> : vector<24x256xf32>
    %63 = tpu.matmul %2, %62, %cst_37 {dimension_numbers = #tpu.dot_dimension_numbers<[1], [0], [0], [1], [0, 0, 1, 1], [], []>} : vector<24x4xf32>, vector<4x256xf32>, vector<24x256xf32> -> vector<24x256xf32>
    %64 = vector.extract_strided_slice %63 {offsets = [16, 0], sizes = [8, 256], strides = [1, 1]} : vector<24x256xf32> to vector<8x256xf32>
    %65 = vector.broadcast %28 : vector<1x256xf32> to vector<8x256xf32>
    %66 = arith.mulf %64, %65 : vector<8x256xf32>
    %67 = arith.truncf %66 : vector<8x256xf32> to vector<8x256xbf16>
    %c0_38 = arith.constant 0 : index
    %c0_39 = arith.constant 0 : index
    %68 = vector.load %arg7[%c0_38, %c0_39] : memref<256x256xbf16, #tpu.memory_space<vmem>>, vector<256x256xbf16>
    %cst_40 = arith.constant dense<0.000000e+00> : vector<8x256xf32>
    %69 = tpu.matmul %67, %68, %cst_40 {dimension_numbers = #tpu.dot_dimension_numbers<[1], [0], [0], [1], [0, 0, 1, 1], [], []>} : vector<8x256xbf16>, vector<256x256xbf16>, vector<8x256xf32> -> vector<8x256xf32>
    %70 = vector.broadcast %28 : vector<1x256xf32> to vector<8x256xf32>
    %71 = arith.mulf %69, %70 : vector<8x256xf32>
    %72 = vector.extract_strided_slice %63 {offsets = [8, 0], sizes = [8, 256], strides = [1, 1]} : vector<24x256xf32> to vector<8x256xf32>
    %73 = arith.addf %71, %72 : vector<8x256xf32>
    %74 = vector.broadcast %28 : vector<1x256xf32> to vector<8x256xf32>
    %75 = arith.mulf %73, %74 : vector<8x256xf32>
    %76 = arith.truncf %75 : vector<8x256xf32> to vector<8x256xbf16>
    %c0_41 = arith.constant 0 : index
    %c0_42 = arith.constant 0 : index
    %77 = vector.load %arg7[%c0_41, %c0_42] : memref<256x256xbf16, #tpu.memory_space<vmem>>, vector<256x256xbf16>
    %cst_43 = arith.constant dense<0.000000e+00> : vector<8x256xf32>
    %78 = tpu.matmul %76, %77, %cst_43 {dimension_numbers = #tpu.dot_dimension_numbers<[1], [0], [0], [1], [0, 0, 1, 1], [], []>} : vector<8x256xbf16>, vector<256x256xbf16>, vector<8x256xf32> -> vector<8x256xf32>
    %79 = vector.broadcast %28 : vector<1x256xf32> to vector<8x256xf32>
    %80 = arith.mulf %78, %79 : vector<8x256xf32>
    %81 = vector.extract_strided_slice %63 {offsets = [0, 0], sizes = [8, 256], strides = [1, 1]} : vector<24x256xf32> to vector<8x256xf32>
    %82 = arith.addf %80, %81 : vector<8x256xf32>
    %83 = vector.broadcast %3 : vector<8x1xf32> to vector<8x256xf32>
    %84 = arith.addf %82, %83 : vector<8x256xf32>
    %c0_44 = arith.constant 0 : index
    %c0_45 = arith.constant 0 : index
    %85 = vector.load %arg6[%c0_44, %c0_45] : memref<8x512xf32, #tpu.memory_space<vmem>>, vector<8x256xf32>
    tpu.vector_store %arg6[%c0_44, %c0_45], %84 {strides = array<i32>} : memref<8x512xf32, #tpu.memory_space<vmem>>, vector<8x256xf32>,
    %c0_46 = arith.constant 0 : index
    %c256 = arith.constant 256 : index
    %86 = vector.load %arg1[%c0_46, %c256] : memref<48x512xf32, #tpu.memory_space<vmem>>, vector<16x256xf32>
    %c0_47 = arith.constant 0 : index
    %c256_48 = arith.constant 256 : index
    %87 = vector.load %arg2[%c0_47, %c256_48] : memref<3x512xf32, #tpu.memory_space<vmem>>, vector<1x256xf32>
    %88 = vector.broadcast %87 : vector<1x256xf32> to vector<16x256xf32>
    %89 = arith.subf %86, %88 : vector<16x256xf32>
    %90 = arith.mulf %89, %89 : vector<16x256xf32>
    %c16_49 = arith.constant 16 : index
    %c256_50 = arith.constant 256 : index
    %91 = vector.load %arg1[%c16_49, %c256_50] : memref<48x512xf32, #tpu.memory_space<vmem>>, vector<16x256xf32>
    %c1_51 = arith.constant 1 : index
    %c256_52 = arith.constant 256 : index
    %92 = vector.load %arg2[%c1_51, %c256_52] : memref<3x512xf32, #tpu.memory_space<vmem>>, vector<1x256xf32>
    %93 = vector.broadcast %92 : vector<1x256xf32> to vector<16x256xf32>
    %94 = arith.subf %91, %93 : vector<16x256xf32>
    %95 = arith.mulf %94, %94 : vector<16x256xf32>
    %96 = arith.addf %90, %95 : vector<16x256xf32>
    %c32_53 = arith.constant 32 : index
    %c256_54 = arith.constant 256 : index
    %97 = vector.load %arg1[%c32_53, %c256_54] : memref<48x512xf32, #tpu.memory_space<vmem>>, vector<16x256xf32>
    %c2_55 = arith.constant 2 : index
    %c256_56 = arith.constant 256 : index
    %98 = vector.load %arg2[%c2_55, %c256_56] : memref<3x512xf32, #tpu.memory_space<vmem>>, vector<1x256xf32>
    %99 = vector.broadcast %98 : vector<1x256xf32> to vector<16x256xf32>
    %100 = arith.subf %97, %99 : vector<16x256xf32>
    %101 = arith.mulf %100, %100 : vector<16x256xf32>
    %102 = arith.addf %96, %101 : vector<16x256xf32>
    %cst_57 = arith.constant 0.000000e+00 : f32
    %103 = vector.broadcast %cst_57 : f32 to vector<16x256xf32>
    %104 = arith.subf %103, %102 : vector<16x256xf32>
    %cst_58 = arith.constant 5.000000e-01 : f32
    %105 = vector.broadcast %cst_58 : f32 to vector<16x256xf32>
    %106 = arith.mulf %104, %105 : vector<16x256xf32>
    %107 = math.exp %106 : vector<16x256xf32>
    %cst_59 = arith.constant dense<0.000000e+00> : vector<256xf32>
    %108 = vector.multi_reduction <add>, %107, %cst_59 [0] : vector<16x256xf32> to vector<256xf32>
    %109 = vector.shape_cast %108 : vector<256xf32> to vector<1x256xf32>
    %110 = math.rsqrt %109 : vector<1x256xf32>
    %111 = arith.truncf %107 : vector<16x256xf32> to vector<16x256xbf16>
    %112 = vector.extract_strided_slice %111 {offsets = [0, 0], sizes = [16, 16], strides = [1, 1]} : vector<16x256xbf16> to vector<16x16xbf16>
    %c0_60 = arith.constant 0 : index
    %c0_61 = arith.constant 0 : index
    %113 = vector.load %arg7[%c0_60, %c0_61] : memref<256x256xbf16, #tpu.memory_space<vmem>>, vector<16x16xbf16>
    tpu.vector_store %arg7[%c0_60, %c0_61], %112 {strides = array<i32>} : memref<256x256xbf16, #tpu.memory_space<vmem>>, vector<16x16xbf16>,
    %114 = vector.extract_strided_slice %111 {offsets = [0, 16], sizes = [16, 16], strides = [1, 1]} : vector<16x256xbf16> to vector<16x16xbf16>
    %c16_62 = arith.constant 16 : index
    %c16_63 = arith.constant 16 : index
    %115 = vector.load %arg7[%c16_62, %c16_63] : memref<256x256xbf16, #tpu.memory_space<vmem>>, vector<16x16xbf16>
    tpu.vector_store %arg7[%c16_62, %c16_63], %114 {strides = array<i32>} : memref<256x256xbf16, #tpu.memory_space<vmem>>, vector<16x16xbf16>,
    %116 = vector.extract_strided_slice %111 {offsets = [0, 32], sizes = [16, 16], strides = [1, 1]} : vector<16x256xbf16> to vector<16x16xbf16>
    %c32_64 = arith.constant 32 : index
    %c32_65 = arith.constant 32 : index
    %117 = vector.load %arg7[%c32_64, %c32_65] : memref<256x256xbf16, #tpu.memory_space<vmem>>, vector<16x16xbf16>
    tpu.vector_store %arg7[%c32_64, %c32_65], %116 {strides = array<i32>} : memref<256x256xbf16, #tpu.memory_space<vmem>>, vector<16x16xbf16>,
    %118 = vector.extract_strided_slice %111 {offsets = [0, 48], sizes = [16, 16], strides = [1, 1]} : vector<16x256xbf16> to vector<16x16xbf16>
    %c48_66 = arith.constant 48 : index
    %c48_67 = arith.constant 48 : index
    %119 = vector.load %arg7[%c48_66, %c48_67] : memref<256x256xbf16, #tpu.memory_space<vmem>>, vector<16x16xbf16>
    tpu.vector_store %arg7[%c48_66, %c48_67], %118 {strides = array<i32>} : memref<256x256xbf16, #tpu.memory_space<vmem>>, vector<16x16xbf16>,
    %120 = vector.extract_strided_slice %111 {offsets = [0, 64], sizes = [16, 16], strides = [1, 1]} : vector<16x256xbf16> to vector<16x16xbf16>
    %c64_68 = arith.constant 64 : index
    %c64_69 = arith.constant 64 : index
    %121 = vector.load %arg7[%c64_68, %c64_69] : memref<256x256xbf16, #tpu.memory_space<vmem>>, vector<16x16xbf16>
    tpu.vector_store %arg7[%c64_68, %c64_69], %120 {strides = array<i32>} : memref<256x256xbf16, #tpu.memory_space<vmem>>, vector<16x16xbf16>,
    %122 = vector.extract_strided_slice %111 {offsets = [0, 80], sizes = [16, 16], strides = [1, 1]} : vector<16x256xbf16> to vector<16x16xbf16>
    %c80_70 = arith.constant 80 : index
    %c80_71 = arith.constant 80 : index
    %123 = vector.load %arg7[%c80_70, %c80_71] : memref<256x256xbf16, #tpu.memory_space<vmem>>, vector<16x16xbf16>
    tpu.vector_store %arg7[%c80_70, %c80_71], %122 {strides = array<i32>} : memref<256x256xbf16, #tpu.memory_space<vmem>>, vector<16x16xbf16>,
    %124 = vector.extract_strided_slice %111 {offsets = [0, 96], sizes = [16, 16], strides = [1, 1]} : vector<16x256xbf16> to vector<16x16xbf16>
    %c96_72 = arith.constant 96 : index
    %c96_73 = arith.constant 96 : index
    %125 = vector.load %arg7[%c96_72, %c96_73] : memref<256x256xbf16, #tpu.memory_space<vmem>>, vector<16x16xbf16>
    tpu.vector_store %arg7[%c96_72, %c96_73], %124 {strides = array<i32>} : memref<256x256xbf16, #tpu.memory_space<vmem>>, vector<16x16xbf16>,
    %126 = vector.extract_strided_slice %111 {offsets = [0, 112], sizes = [16, 16], strides = [1, 1]} : vector<16x256xbf16> to vector<16x16xbf16>
    %c112_74 = arith.constant 112 : index
    %c112_75 = arith.constant 112 : index
    %127 = vector.load %arg7[%c112_74, %c112_75] : memref<256x256xbf16, #tpu.memory_space<vmem>>, vector<16x16xbf16>
    tpu.vector_store %arg7[%c112_74, %c112_75], %126 {strides = array<i32>} : memref<256x256xbf16, #tpu.memory_space<vmem>>, vector<16x16xbf16>,
    %128 = vector.extract_strided_slice %111 {offsets = [0, 128], sizes = [16, 16], strides = [1, 1]} : vector<16x256xbf16> to vector<16x16xbf16>
    %c128_76 = arith.constant 128 : index
    %c128_77 = arith.constant 128 : index
    %129 = vector.load %arg7[%c128_76, %c128_77] : memref<256x256xbf16, #tpu.memory_space<vmem>>, vector<16x16xbf16>
    tpu.vector_store %arg7[%c128_76, %c128_77], %128 {strides = array<i32>} : memref<256x256xbf16, #tpu.memory_space<vmem>>, vector<16x16xbf16>,
    %130 = vector.extract_strided_slice %111 {offsets = [0, 144], sizes = [16, 16], strides = [1, 1]} : vector<16x256xbf16> to vector<16x16xbf16>
    %c144_78 = arith.constant 144 : index
    %c144_79 = arith.constant 144 : index
    %131 = vector.load %arg7[%c144_78, %c144_79] : memref<256x256xbf16, #tpu.memory_space<vmem>>, vector<16x16xbf16>
    tpu.vector_store %arg7[%c144_78, %c144_79], %130 {strides = array<i32>} : memref<256x256xbf16, #tpu.memory_space<vmem>>, vector<16x16xbf16>,
    %132 = vector.extract_strided_slice %111 {offsets = [0, 160], sizes = [16, 16], strides = [1, 1]} : vector<16x256xbf16> to vector<16x16xbf16>
    %c160_80 = arith.constant 160 : index
    %c160_81 = arith.constant 160 : index
    %133 = vector.load %arg7[%c160_80, %c160_81] : memref<256x256xbf16, #tpu.memory_space<vmem>>, vector<16x16xbf16>
    tpu.vector_store %arg7[%c160_80, %c160_81], %132 {strides = array<i32>} : memref<256x256xbf16, #tpu.memory_space<vmem>>, vector<16x16xbf16>,
    %134 = vector.extract_strided_slice %111 {offsets = [0, 176], sizes = [16, 16], strides = [1, 1]} : vector<16x256xbf16> to vector<16x16xbf16>
    %c176_82 = arith.constant 176 : index
    %c176_83 = arith.constant 176 : index
    %135 = vector.load %arg7[%c176_82, %c176_83] : memref<256x256xbf16, #tpu.memory_space<vmem>>, vector<16x16xbf16>
    tpu.vector_store %arg7[%c176_82, %c176_83], %134 {strides = array<i32>} : memref<256x256xbf16, #tpu.memory_space<vmem>>, vector<16x16xbf16>,
    %136 = vector.extract_strided_slice %111 {offsets = [0, 192], sizes = [16, 16], strides = [1, 1]} : vector<16x256xbf16> to vector<16x16xbf16>
    %c192_84 = arith.constant 192 : index
    %c192_85 = arith.constant 192 : index
    %137 = vector.load %arg7[%c192_84, %c192_85] : memref<256x256xbf16, #tpu.memory_space<vmem>>, vector<16x16xbf16>
    tpu.vector_store %arg7[%c192_84, %c192_85], %136 {strides = array<i32>} : memref<256x256xbf16, #tpu.memory_space<vmem>>, vector<16x16xbf16>,
    %138 = vector.extract_strided_slice %111 {offsets = [0, 208], sizes = [16, 16], strides = [1, 1]} : vector<16x256xbf16> to vector<16x16xbf16>
    %c208_86 = arith.constant 208 : index
    %c208_87 = arith.constant 208 : index
    %139 = vector.load %arg7[%c208_86, %c208_87] : memref<256x256xbf16, #tpu.memory_space<vmem>>, vector<16x16xbf16>
    tpu.vector_store %arg7[%c208_86, %c208_87], %138 {strides = array<i32>} : memref<256x256xbf16, #tpu.memory_space<vmem>>, vector<16x16xbf16>,
    %140 = vector.extract_strided_slice %111 {offsets = [0, 224], sizes = [16, 16], strides = [1, 1]} : vector<16x256xbf16> to vector<16x16xbf16>
    %c224_88 = arith.constant 224 : index
    %c224_89 = arith.constant 224 : index
    %141 = vector.load %arg7[%c224_88, %c224_89] : memref<256x256xbf16, #tpu.memory_space<vmem>>, vector<16x16xbf16>
    tpu.vector_store %arg7[%c224_88, %c224_89], %140 {strides = array<i32>} : memref<256x256xbf16, #tpu.memory_space<vmem>>, vector<16x16xbf16>,
    %142 = vector.extract_strided_slice %111 {offsets = [0, 240], sizes = [16, 16], strides = [1, 1]} : vector<16x256xbf16> to vector<16x16xbf16>
    %c240_90 = arith.constant 240 : index
    %c240_91 = arith.constant 240 : index
    %143 = vector.load %arg7[%c240_90, %c240_91] : memref<256x256xbf16, #tpu.memory_space<vmem>>, vector<16x16xbf16>
    tpu.vector_store %arg7[%c240_90, %c240_91], %142 {strides = array<i32>} : memref<256x256xbf16, #tpu.memory_space<vmem>>, vector<16x16xbf16>,
    %c0_92 = arith.constant 0 : index
    %c256_93 = arith.constant 256 : index
    %144 = vector.load %arg3[%c0_92, %c256_93] : memref<4x512xf32, #tpu.memory_space<vmem>>, vector<4x256xf32>
    %cst_94 = arith.constant dense<0.000000e+00> : vector<24x256xf32>
    %145 = tpu.matmul %2, %144, %cst_94 {dimension_numbers = #tpu.dot_dimension_numbers<[1], [0], [0], [1], [0, 0, 1, 1], [], []>} : vector<24x4xf32>, vector<4x256xf32>, vector<24x256xf32> -> vector<24x256xf32>
    %146 = vector.extract_strided_slice %145 {offsets = [16, 0], sizes = [8, 256], strides = [1, 1]} : vector<24x256xf32> to vector<8x256xf32>
    %147 = vector.broadcast %110 : vector<1x256xf32> to vector<8x256xf32>
    %148 = arith.mulf %146, %147 : vector<8x256xf32>
    %149 = arith.truncf %148 : vector<8x256xf32> to vector<8x256xbf16>
    %c0_95 = arith.constant 0 : index
    %c0_96 = arith.constant 0 : index
    %150 = vector.load %arg7[%c0_95, %c0_96] : memref<256x256xbf16, #tpu.memory_space<vmem>>, vector<256x256xbf16>
    %cst_97 = arith.constant dense<0.000000e+00> : vector<8x256xf32>
    %151 = tpu.matmul %149, %150, %cst_97 {dimension_numbers = #tpu.dot_dimension_numbers<[1], [0], [0], [1], [0, 0, 1, 1], [], []>} : vector<8x256xbf16>, vector<256x256xbf16>, vector<8x256xf32> -> vector<8x256xf32>
    %152 = vector.broadcast %110 : vector<1x256xf32> to vector<8x256xf32>
    %153 = arith.mulf %151, %152 : vector<8x256xf32>
    %154 = vector.extract_strided_slice %145 {offsets = [8, 0], sizes = [8, 256], strides = [1, 1]} : vector<24x256xf32> to vector<8x256xf32>
    %155 = arith.addf %153, %154 : vector<8x256xf32>
    %156 = vector.broadcast %110 : vector<1x256xf32> to vector<8x256xf32>
    %157 = arith.mulf %155, %156 : vector<8x256xf32>
    %158 = arith.truncf %157 : vector<8x256xf32> to vector<8x256xbf16>
    %c0_98 = arith.constant 0 : index
    %c0_99 = arith.constant 0 : index
    %159 = vector.load %arg7[%c0_98, %c0_99] : memref<256x256xbf16, #tpu.memory_space<vmem>>, vector<256x256xbf16>
    %cst_100 = arith.constant dense<0.000000e+00> : vector<8x256xf32>
    %160 = tpu.matmul %158, %159, %cst_100 {dimension_numbers = #tpu.dot_dimension_numbers<[1], [0], [0], [1], [0, 0, 1, 1], [], []>} : vector<8x256xbf16>, vector<256x256xbf16>, vector<8x256xf32> -> vector<8x256xf32>
    %161 = vector.broadcast %110 : vector<1x256xf32> to vector<8x256xf32>
    %162 = arith.mulf %160, %161 : vector<8x256xf32>
    %163 = vector.extract_strided_slice %145 {offsets = [0, 0], sizes = [8, 256], strides = [1, 1]} : vector<24x256xf32> to vector<8x256xf32>
    %164 = arith.addf %162, %163 : vector<8x256xf32>
    %165 = vector.broadcast %3 : vector<8x1xf32> to vector<8x256xf32>
    %166 = arith.addf %164, %165 : vector<8x256xf32>
    %c0_101 = arith.constant 0 : index
    %c256_102 = arith.constant 256 : index
    %167 = vector.load %arg6[%c0_101, %c256_102] : memref<8x512xf32, #tpu.memory_space<vmem>>, vector<8x256xf32>
    tpu.vector_store %arg6[%c0_101, %c256_102], %166 {strides = array<i32>} : memref<8x512xf32, #tpu.memory_space<vmem>>, vector<8x256xf32>,
    return
  }
  func.func @transform_0(%arg0: i32) -> (i32, i32) {
    %c0_i32 = arith.constant 0 : i32
    %c0_i32_0 = arith.constant 0 : i32
    return %c0_i32, %arg0 : i32, i32
  }
  func.func @transform_1(%arg0: i32) -> (i32, i32) {
    %c0_i32 = arith.constant 0 : i32
    %c0_i32_0 = arith.constant 0 : i32
    return %c0_i32, %arg0 : i32, i32
  }
  func.func @transform_2(%arg0: i32) -> (i32, i32) {
    %c0_i32 = arith.constant 0 : i32
    %c0_i32_0 = arith.constant 0 : i32
    return %c0_i32, %arg0 : i32, i32
  }
  func.func @transform_3(%arg0: i32) -> (i32, i32) {
    %c0_i32 = arith.constant 0 : i32
    %c0_i32_0 = arith.constant 0 : i32
    %c0_i32_1 = arith.constant 0 : i32
    return %c0_i32, %c0_i32_0 : i32, i32
  }
  func.func @transform_4(%arg0: i32) -> (i32, i32) {
    %c0_i32 = arith.constant 0 : i32
    %c0_i32_0 = arith.constant 0 : i32
    %c0_i32_1 = arith.constant 0 : i32
    return %c0_i32, %c0_i32_0 : i32, i32
  }
  func.func @transform_5(%arg0: i32) -> (i32, i32) {
    %c0_i32 = arith.constant 0 : i32
    %c0_i32_0 = arith.constant 0 : i32
    return %c0_i32, %arg0 : i32, i32
  }
}

</mosaic_0001>

<llo_original>
// kernel: kernel_graph_filter.1
$region0: #{kernel_graph_filter.1}
  #allocation0 [shape = 'u32[]', space=smem, size = 0x4, offset = 0x4, fixed_abs, tag = 'smem constant byte address 0x4 - core index']
  #allocation1 [shape = 'u32[144,128]{1,0:T(1,128)}', space=vmem, size = 0x12000, scoped, tag = 'internal scratch']
  #allocation2 [shape = 'bf16[256,256]{1,0:T(16,128)(2,1)}', space=vmem, size = 0x20000, scoped, tag = 'scratch operand']
  %s0 = inlined_call_operand.vmem [shape: f32[48,512], index: 0, kind: input, shape index: {}]
  %s1 = inlined_call_operand.vmem [shape: f32[3,512], index: 1, kind: input, shape index: {}]
  %s2 = inlined_call_operand.vmem [shape: f32[4,512], index: 2, kind: input, shape index: {}]
  %s3 = inlined_call_operand.vmem [shape: f32[24,4], index: 3, kind: input, shape index: {}]
  %s4 = inlined_call_operand.vmem [shape: f32[8,1], index: 4, kind: input, shape index: {}]
  %s5 = inlined_call_operand.vmem [shape: f32[8,512], index: 5, kind: output, shape index: {}]
  %s6 = sld [smem:[#allocation0]]
  $region30: #{kernel_graph_filter.1} parent=0
    _
  %s8 = ssub.s32 1, %s6
  %s9 = scalar_select 0, %s8, %s6
  // Predicated region
  $region2: #{kernel_graph_filter.1} parent=0 // pred_check
    _
  $region3: #{kernel_graph_filter.1} parent=0 // pred_check_branch
    %11 = sbr.rel (0) target = $region5
  $region4: #{kernel_graph_filter.1} parent=0 // pred_region
    _
  $region5: #{kernel_graph_filter.1} parent=0 // pred_fallthru
    _
  // Predicated region
  $region6: #{kernel_graph_filter.1} parent=0 // pred_check
    _
  $region7: #{kernel_graph_filter.1} parent=0 // pred_check_branch
    %13 = sbr.rel (0) target = $region9
  $region8: #{kernel_graph_filter.1} parent=0 // pred_region
    _
  $region9: #{kernel_graph_filter.1} parent=0 // pred_fallthru
    _
  // Predicated region
  $region10: #{kernel_graph_filter.1} parent=0 // pred_check
    _
  $region11: #{kernel_graph_filter.1} parent=0 // pred_check_branch
    %15 = sbr.rel (0) target = $region13
  $region12: #{kernel_graph_filter.1} parent=0 // pred_region
    _
  $region13: #{kernel_graph_filter.1} parent=0 // pred_fallthru
    _
  // Predicated region
  $region14: #{kernel_graph_filter.1} parent=0 // pred_check
    _
  $region15: #{kernel_graph_filter.1} parent=0 // pred_check_branch
    %17 = sbr.rel (0) target = $region17
  $region16: #{kernel_graph_filter.1} parent=0 // pred_region
    _
  $region17: #{kernel_graph_filter.1} parent=0 // pred_fallthru
    _
  // Predicated region
  $region18: #{kernel_graph_filter.1} parent=0 // pred_check
    _
  $region19: #{kernel_graph_filter.1} parent=0 // pred_check_branch
    %19 = sbr.rel (0) target = $region21
  $region20: #{kernel_graph_filter.1} parent=0 // pred_region
    _
  $region21: #{kernel_graph_filter.1} parent=0 // pred_fallthru
    _
  %21 = vst [vmem:[#allocation2] sm:$0xff] 0
  %22 = vst [vmem:[#allocation2 + $0x8] sm:$0xff] 0
  %23 = vst [vmem:[#allocation2 + $0x10] sm:$0xff] 0
  %24 = vst [vmem:[#allocation2 + $0x18] sm:$0xff] 0
  %25 = vst [vmem:[#allocation2 + $0x20] sm:$0xff] 0
  %26 = vst [vmem:[#allocation2 + $0x28] sm:$0xff] 0
  %27 = vst [vmem:[#allocation2 + $0x30] sm:$0xff] 0
  %28 = vst [vmem:[#allocation2 + $0x38] sm:$0xff] 0
  %29 = vst [vmem:[#allocation2 + $0x40] sm:$0xff] 0
  %30 = vst [vmem:[#allocation2 + $0x48] sm:$0xff] 0
  %31 = vst [vmem:[#allocation2 + $0x50] sm:$0xff] 0
  %32 = vst [vmem:[#allocation2 + $0x58] sm:$0xff] 0
  %33 = vst [vmem:[#allocation2 + $0x60] sm:$0xff] 0
  %34 = vst [vmem:[#allocation2 + $0x68] sm:$0xff] 0
  %35 = vst [vmem:[#allocation2 + $0x70] sm:$0xff] 0
  %36 = vst [vmem:[#allocation2 + $0x78] sm:$0xff] 0
  %37 = vst [vmem:[#allocation2 + $0x80] sm:$0xff] 0
  %38 = vst [vmem:[#allocation2 + $0x88] sm:$0xff] 0
  %39 = vst [vmem:[#allocation2 + $0x90] sm:$0xff] 0
  %40 = vst [vmem:[#allocation2 + $0x98] sm:$0xff] 0
  %41 = vst [vmem:[#allocation2 + $0xa0] sm:$0xff] 0
  %42 = vst [vmem:[#allocation2 + $0xa8] sm:$0xff] 0
  %43 = vst [vmem:[#allocation2 + $0xb0] sm:$0xff] 0
  %44 = vst [vmem:[#allocation2 + $0xb8] sm:$0xff] 0
  %45 = vst [vmem:[#allocation2 + $0xc0] sm:$0xff] 0
  %46 = vst [vmem:[#allocation2 + $0xc8] sm:$0xff] 0
  %47 = vst [vmem:[#allocation2 + $0xd0] sm:$0xff] 0
  %48 = vst [vmem:[#allocation2 + $0xd8] sm:$0xff] 0
  %49 = vst [vmem:[#allocation2 + $0xe0] sm:$0xff] 0
  %50 = vst [vmem:[#allocation2 + $0xe8] sm:$0xff] 0
  %51 = vst [vmem:[#allocation2 + $0xf0] sm:$0xff] 0
  %52 = vst [vmem:[#allocation2 + $0xf8] sm:$0xff] 0
  %v53 = vld [vmem:[%s3] sm:$0xff]
  %v54 = vld [vmem:[%s3 + $0x8] sm:$0xff]
  %v55 = vld [vmem:[%s3 + $0x10] sm:$0xff]
  %v56 = vld [vmem:[%s4] sm:$0xff]
  %v57 = vld [vmem:[%s0] sm:$0xff]
  %v58 = vld [vmem:[%s0 + $0x8] sm:$0xff]
  %v59 = vld [vmem:[%s0 + $0x20] sm:$0xff]
  %v60 = vld [vmem:[%s0 + $0x28] sm:$0xff]
  %v61 = vld [vmem:[%s1] ss:$4 sm:$0x3]
  %v63 = vlaneseq
  %v64 = vshrl.u32 %v63, 7
  %v65 = vsub.s32 0, %v64
  %v66 = vrot.slane %v61, %v65
  %v67 = vlaneseq
  %v68 = vshrl.u32 %v67, 7
  %v69 = vsub.s32 1, %v68
  %v70 = vrot.slane %v61, %v69
  %v73 = vsub.f32 %v57, %v66
  %v74 = vsub.f32 %v58, %v70
  %v75 = vsub.f32 %v59, %v66
  %v76 = vsub.f32 %v60, %v70
  %v77 = vmul.f32 %v73, %v73
  %v78 = vmul.f32 %v74, %v74
  %v79 = vmul.f32 %v75, %v75
  %v80 = vmul.f32 %v76, %v76
  %v81 = vld [vmem:[%s0 + $0x40] sm:$0xff]
  %v82 = vld [vmem:[%s0 + $0x48] sm:$0xff]
  %v83 = vld [vmem:[%s0 + $0x60] sm:$0xff]
  %v84 = vld [vmem:[%s0 + $0x68] sm:$0xff]
  %s85 = scalar_lea.vmem %s1, 1
  %v86 = vld [vmem:[%s85] ss:$4 sm:$0x3]
  %v88 = vlaneseq
  %v89 = vshrl.u32 %v88, 7
  %v90 = vsub.s32 0, %v89
  %v91 = vrot.slane %v86, %v90
  %v92 = vlaneseq
  %v93 = vshrl.u32 %v92, 7
  %v94 = vsub.s32 1, %v93
  %v95 = vrot.slane %v86, %v94
  %v98 = vsub.f32 %v81, %v91
  %v99 = vsub.f32 %v82, %v95
  %v100 = vsub.f32 %v83, %v91
  %v101 = vsub.f32 %v84, %v95
  %v102 = vmul.f32 %v98, %v98
  %v103 = vmul.f32 %v99, %v99
  %v104 = vmul.f32 %v100, %v100
  %v105 = vmul.f32 %v101, %v101
  %v106 = vadd.f32 %v77, %v102
  %v107 = vadd.f32 %v78, %v103
  %v108 = vadd.f32 %v79, %v104
  %v109 = vadd.f32 %v80, %v105
  %v110 = vld [vmem:[%s0 + $0x80] sm:$0xff]
  %v111 = vld [vmem:[%s0 + $0x88] sm:$0xff]
  %v112 = vld [vmem:[%s0 + $0xa0] sm:$0xff]
  %v113 = vld [vmem:[%s0 + $0xa8] sm:$0xff]
  %s114 = scalar_lea.vmem %s1, 2
  %v115 = vld [vmem:[%s114] ss:$4 sm:$0x3]
  %v117 = vlaneseq
  %v118 = vshrl.u32 %v117, 7
  %v119 = vsub.s32 0, %v118
  %v120 = vrot.slane %v115, %v119
  %v121 = vlaneseq
  %v122 = vshrl.u32 %v121, 7
  %v123 = vsub.s32 1, %v122
  %v124 = vrot.slane %v115, %v123
  %v127 = vsub.f32 %v110, %v120
  %v128 = vsub.f32 %v111, %v124
  %v129 = vsub.f32 %v112, %v120
  %v130 = vsub.f32 %v113, %v124
  %v131 = vmul.f32 %v127, %v127
  %v132 = vmul.f32 %v128, %v128
  %v133 = vmul.f32 %v129, %v129
  %v134 = vmul.f32 %v130, %v130
  %v135 = vadd.f32 %v106, %v131
  %v136 = vadd.f32 %v107, %v132
  %v137 = vadd.f32 %v108, %v133
  %v138 = vadd.f32 %v109, %v134
  %v139 = vsub.f32 0.0, %v135
  %v140 = vsub.f32 0.0, %v136
  %v141 = vsub.f32 0.0, %v137
  %v142 = vsub.f32 0.0, %v138
  %v143 = vmul.f32 %v139, 0.5
  %v144 = vmul.f32 %v140, 0.5
  %v145 = vmul.f32 %v141, 0.5
  %v146 = vmul.f32 %v142, 0.5
  %v147 = vmul.f32 %v143, 1.442695
  %v148 = vpow.pop %v147
  %v149 = vmul.f32 %v144, 1.442695
  %v150 = vpow.pop %v149
  %v151 = vmul.f32 %v145, 1.442695
  %v152 = vpow.pop %v151
  %v153 = vmul.f32 %v146, 1.442695
  %v154 = vpow.pop %v153
  %v155 = vadd.f32 %v148, %v152
  %v156 = vrot.slane %v155, 4
  %v157 = vadd.f32 %v155, %v156
  %v158 = vrot.slane %v157, 2
  %v159 = vadd.f32 %v157, %v158
  %v160 = vrot.slane %v159, 1
  %v161 = vadd.f32 %v159, %v160
  %v162 = vadd.f32 %v150, %v154
  %v163 = vrot.slane %v162, 4
  %v164 = vadd.f32 %v162, %v163
  %v165 = vrot.slane %v164, 2
  %v166 = vadd.f32 %v164, %v165
  %v167 = vrot.slane %v166, 1
  %v168 = vadd.f32 %v166, %v167
  %v169 = vrsqrt.pop %v161
  %v170 = vrsqrt.pop %v168
  %v171 = vpack.c.bf16 %v152, %v148
  %v172 = vpack.c.bf16 %v154, %v150
  %vm173 = vcmask 130048
  %174 = vst.msk [vmem:[#allocation2] sm:$0xff] %vm173, %v171
  %vm175 = vcmask 261248
  %176 = vst.msk [vmem:[#allocation2 + $0x10] sm:$0xff] %vm175, %v171
  %vm177 = vcmask 392448
  %178 = vst.msk [vmem:[#allocation2 + $0x20] sm:$0xff] %vm177, %v171
  %vm179 = vcmask 523648
  %180 = vst.msk [vmem:[#allocation2 + $0x30] sm:$0xff] %vm179, %v171
  %vm181 = vcmask 654848
  %182 = vst.msk [vmem:[#allocation2 + $0x40] sm:$0xff] %vm181, %v171
  %vm183 = vcmask 786048
  %184 = vst.msk [vmem:[#allocation2 + $0x50] sm:$0xff] %vm183, %v171
  %vm185 = vcmask 917248
  %186 = vst.msk [vmem:[#allocation2 + $0x60] sm:$0xff] %vm185, %v171
  %vm187 = vcmask 1048448
  %188 = vst.msk [vmem:[#allocation2 + $0x70] sm:$0xff] %vm187, %v171
  %189 = vst.msk [vmem:[#allocation2 + $0x88] sm:$0xff] %vm173, %v172
  %190 = vst.msk [vmem:[#allocation2 + $0x98] sm:$0xff] %vm175, %v172
  %191 = vst.msk [vmem:[#allocation2 + $0xa8] sm:$0xff] %vm177, %v172
  %192 = vst.msk [vmem:[#allocation2 + $0xb8] sm:$0xff] %vm179, %v172
  %193 = vst.msk [vmem:[#allocation2 + $0xc8] sm:$0xff] %vm181, %v172
  %194 = vst.msk [vmem:[#allocation2 + $0xd8] sm:$0xff] %vm183, %v172
  %195 = vst.msk [vmem:[#allocation2 + $0xe8] sm:$0xff] %vm185, %v172
  %196 = vst.msk [vmem:[#allocation2 + $0xf8] sm:$0xff] %vm187, %v172
  %v197 = vld [vmem:[%s2] sm:$0xff]
  %v199 = vcombine.high %v197, %v197
  %vm200 = vcmask 31744
  %v202 = vsel %vm200, %v53, 0
  %v205 = vsel %vm200, %v54, 0
  %v208 = vsel %vm200, %v55, 0
  %vm210 = vcmask 1043456
  %v211 = vsel %vm210, %v197, 0
  %v213 = vsel %vm210, %v199, 0
  %215 = vmatprep.subr.mxu0 %v213
  %216 = vmatpush1.msra.mxu0 %v211
  %217 = vmatprep.subr.mxu0 0.0
  %218 = vmatpush1.msra.mxu0 0.0
  %219 = vmatprep.subr.mxu0 0.0
  %220 = vmatpush1.msra.mxu0 0.0
  %221 = vmatprep.subr.mxu0 0.0
  %222 = vmatpush1.msra.mxu0 0.0
  %223 = vmatprep.subr.mxu0 0.0
  %224 = vmatpush1.msra.mxu0 0.0
  %225 = vmatprep.subr.mxu0 0.0
  %226 = vmatpush1.msra.mxu0 0.0
  %227 = vmatprep.subr.mxu0 0.0
  %228 = vmatpush1.msra.mxu0 0.0
  %229 = vmatprep.subr.mxu0 0.0
  %230 = vmatpush1.msra.mxu0 0.0
  %231 = vmatprep.subr.mxu0 0.0
  %232 = vmatpush1.msra.mxu0 0.0
  %233 = vmatprep.subr.mxu0 0.0
  %234 = vmatpush1.msra.mxu0 0.0
  %235 = vmatprep.subr.mxu0 0.0
  %236 = vmatpush1.msra.mxu0 0.0
  %237 = vmatprep.subr.mxu0 0.0
  %238 = vmatpush1.msra.mxu0 0.0
  %239 = vmatprep.subr.mxu0 0.0
  %240 = vmatpush1.msra.mxu0 0.0
  %241 = vmatprep.subr.mxu0 0.0
  %242 = vmatpush1.msra.mxu0 0.0
  %243 = vmatprep.subr.mxu0 0.0
  %244 = vmatpush1.msra.mxu0 0.0
  %245 = vmatprep.subr.mxu0 0.0
  %246 = vmatpush1.msra.mxu0 0.0
  %247 = vmatprep.subr.mxu0 0.0
  %248 = vmatpush1.msra.mxu0 0.0
  %249 = vmatprep.subr.mxu0 0.0
  %250 = vmatpush1.msra.mxu0 0.0
  %251 = vmatprep.subr.mxu0 0.0
  %252 = vmatpush1.msra.mxu0 0.0
  %253 = vmatprep.subr.mxu0 0.0
  %254 = vmatpush1.msra.mxu0 0.0
  %255 = vmatprep.subr.mxu0 0.0
  %256 = vmatpush1.msra.mxu0 0.0
  %257 = vmatprep.subr.mxu0 0.0
  %258 = vmatpush1.msra.mxu0 0.0
  %259 = vmatprep.subr.mxu0 0.0
  %260 = vmatpush1.msra.mxu0 0.0
  %261 = vmatprep.subr.mxu0 0.0
  %262 = vmatpush1.msra.mxu0 0.0
  %263 = vmatprep.subr.mxu0 0.0
  %264 = vmatpush1.msra.mxu0 0.0
  %265 = vmatprep.subr.mxu0 0.0
  %266 = vmatpush1.msra.mxu0 0.0
  %267 = vmatprep.subr.mxu0 0.0
  %268 = vmatpush1.msra.mxu0 0.0
  %269 = vmatprep.subr.mxu0 0.0
  %270 = vmatpush1.msra.mxu0 0.0
  %271 = vmatprep.subr.mxu0 0.0
  %272 = vmatpush1.msra.mxu0 0.0
  %273 = vmatprep.subr.mxu0 0.0
  %274 = vmatpush1.msra.mxu0 0.0
  %275 = vmatprep.subr.mxu0 0.0
  %276 = vmatpush1.msra.mxu0 0.0
  %277 = vmatprep.subr.mxu0 0.0
  %278 = vmatpush1.msra.mxu0 0.0
  %279 = vmatprep.mubr.f32.mxu0 0.0
  %280 = vmatmul.mubr.f32.gmra.mrb[0].mxu0 %v202
  %v281 = vpop.f32.mrb[0].mxu0
  %v282 = vadd.f32 0.0, %v281
  %v283 = vpop.f32.mrb[0].mxu0
  %v284 = vadd.f32 0.0, %v283
  %285 = vmatprep.mubr.f32.mxu0 0.0
  %286 = vmatmul.mubr.f32.gmra.mrb[0].mxu0 %v205
  %v287 = vpop.f32.mrb[0].mxu0
  %v288 = vadd.f32 0.0, %v287
  %v289 = vpop.f32.mrb[0].mxu0
  %v290 = vadd.f32 0.0, %v289
  %291 = vmatprep.mubr.f32.mxu0 0.0
  %292 = vmatmul.mubr.f32.gmra.mrb[0].mxu0 %v208
  %v293 = vpop.f32.mrb[0].mxu0
  %v294 = vadd.f32 0.0, %v293
  %v295 = vpop.f32.mrb[0].mxu0
  %v296 = vadd.f32 0.0, %v295
  %297 = vdwg.mxu0
  %v298 = vmul.f32 %v294, %v169
  %v299 = vmul.f32 %v296, %v170
  %v300 = vpack.c.bf16 %v298, %v298
  %v301 = vpack.c.bf16 %v299, %v299
  %v302 = vld [vmem:[#allocation2] sm:$0xff]
  %v303 = vld [vmem:[#allocation2 + $0x8] sm:$0xff]
  %v304 = vld [vmem:[#allocation2 + $0x10] sm:$0xff]
  %v305 = vld [vmem:[#allocation2 + $0x18] sm:$0xff]
  %v306 = vld [vmem:[#allocation2 + $0x20] sm:$0xff]
  %v307 = vld [vmem:[#allocation2 + $0x28] sm:$0xff]
  %v308 = vld [vmem:[#allocation2 + $0x30] sm:$0xff]
  %v309 = vld [vmem:[#allocation2 + $0x38] sm:$0xff]
  %v310 = vld [vmem:[#allocation2 + $0x40] sm:$0xff]
  %v311 = vld [vmem:[#allocation2 + $0x48] sm:$0xff]
  %v312 = vld [vmem:[#allocation2 + $0x50] sm:$0xff]
  %v313 = vld [vmem:[#allocation2 + $0x58] sm:$0xff]
  %v314 = vld [vmem:[#allocation2 + $0x60] sm:$0xff]
  %v315 = vld [vmem:[#allocation2 + $0x68] sm:$0xff]
  %v316 = vld [vmem:[#allocation2 + $0x70] sm:$0xff]
  %v317 = vld [vmem:[#allocation2 + $0x78] sm:$0xff]
  %v318 = vld [vmem:[#allocation2 + $0x80] sm:$0xff]
  %v319 = vld [vmem:[#allocation2 + $0x88] sm:$0xff]
  %v320 = vld [vmem:[#allocation2 + $0x90] sm:$0xff]
  %v321 = vld [vmem:[#allocation2 + $0x98] sm:$0xff]
  %v322 = vld [vmem:[#allocation2 + $0xa0] sm:$0xff]
  %v323 = vld [vmem:[#allocation2 + $0xa8] sm:$0xff]
  %v324 = vld [vmem:[#allocation2 + $0xb0] sm:$0xff]
  %v325 = vld [vmem:[#allocation2 + $0xb8] sm:$0xff]
  %v326 = vld [vmem:[#allocation2 + $0xc0] sm:$0xff]
  %v327 = vld [vmem:[#allocation2 + $0xc8] sm:$0xff]
  %v328 = vld [vmem:[#allocation2 + $0xd0] sm:$0xff]
  %v329 = vld [vmem:[#allocation2 + $0xd8] sm:$0xff]
  %v330 = vld [vmem:[#allocation2 + $0xe0] sm:$0xff]
  %v331 = vld [vmem:[#allocation2 + $0xe8] sm:$0xff]
  %v332 = vld [vmem:[#allocation2 + $0xf0] sm:$0xff]
  %v333 = vld [vmem:[#allocation2 + $0xf8] sm:$0xff]
  %334 = vmatprep.subr.bf16.mxu0 %v303
  %335 = vmatpush1.bf16.msra.mxu0 %v302
  %336 = vmatprep.subr.bf16.mxu0 %v305
  %337 = vmatpush1.bf16.msra.mxu0 %v304
  %338 = vmatprep.subr.bf16.mxu0 %v307
  %339 = vmatpush1.bf16.msra.mxu0 %v306
  %340 = vmatprep.subr.bf16.mxu0 %v309
  %341 = vmatpush1.bf16.msra.mxu0 %v308
  %342 = vmatprep.subr.bf16.mxu0 %v311
  %343 = vmatpush1.bf16.msra.mxu0 %v310
  %344 = vmatprep.subr.bf16.mxu0 %v313
  %345 = vmatpush1.bf16.msra.mxu0 %v312
  %346 = vmatprep.subr.bf16.mxu0 %v315
  %347 = vmatpush1.bf16.msra.mxu0 %v314
  %348 = vmatprep.subr.bf16.mxu0 %v317
  %349 = vmatpush1.bf16.msra.mxu0 %v316
  %350 = vmatprep.subr.bf16.mxu0 %v319
  %351 = vmatpush1.bf16.msra.mxu0 %v318
  %352 = vmatprep.subr.bf16.mxu0 %v321
  %353 = vmatpush1.bf16.msra.mxu0 %v320
  %354 = vmatprep.subr.bf16.mxu0 %v323
  %355 = vmatpush1.bf16.msra.mxu0 %v322
  %356 = vmatprep.subr.bf16.mxu0 %v325
  %357 = vmatpush1.bf16.msra.mxu0 %v324
  %358 = vmatprep.subr.bf16.mxu0 %v327
  %359 = vmatpush1.bf16.msra.mxu0 %v326
  %360 = vmatprep.subr.bf16.mxu0 %v329
  %361 = vmatpush1.bf16.msra.mxu0 %v328
  %362 = vmatprep.subr.bf16.mxu0 %v331
  %363 = vmatpush1.bf16.msra.mxu0 %v330
  %364 = vmatprep.subr.bf16.mxu0 %v333
  %365 = vmatpush1.bf16.msra.mxu0 %v332
  %366 = vmatprep.mubr.bf16.mxu0 %v301
  %367 = vmatmul.mubr.bf16.gmra.mrb[0].mxu0 %v300
  %v368 = vpop.f32.mrb[0].mxu0
  %v369 = vadd.f32 0.0, %v368
  %v370 = vpop.f32.mrb[0].mxu0
  %v371 = vadd.f32 0.0, %v370
  %v372 = vpop.f32.mrb[0].mxu0
  %v373 = vpop.f32.mrb[0].mxu0
  %374 = vdwg.mxu0
  %v375 = vmul.f32 %v369, %v169
  %v376 = vmul.f32 %v371, %v170
  %v377 = vadd.f32 %v375, %v288
  %v378 = vadd.f32 %v376, %v290
  %v379 = vmul.f32 %v377, %v169
  %v380 = vmul.f32 %v378, %v170
  %v381 = vpack.c.bf16 %v379, %v379
  %v382 = vpack.c.bf16 %v380, %v380
  %383 = vmatprep.subr.bf16.mxu0 %v303
  %384 = vmatpush1.bf16.msra.mxu0 %v302
  %385 = vmatprep.subr.bf16.mxu0 %v305
  %386 = vmatpush1.bf16.msra.mxu0 %v304
  %387 = vmatprep.subr.bf16.mxu0 %v307
  %388 = vmatpush1.bf16.msra.mxu0 %v306
  %389 = vmatprep.subr.bf16.mxu0 %v309
  %390 = vmatpush1.bf16.msra.mxu0 %v308
  %391 = vmatprep.subr.bf16.mxu0 %v311
  %392 = vmatpush1.bf16.msra.mxu0 %v310
  %393 = vmatprep.subr.bf16.mxu0 %v313
  %394 = vmatpush1.bf16.msra.mxu0 %v312
  %395 = vmatprep.subr.bf16.mxu0 %v315
  %396 = vmatpush1.bf16.msra.mxu0 %v314
  %397 = vmatprep.subr.bf16.mxu0 %v317
  %398 = vmatpush1.bf16.msra.mxu0 %v316
  %399 = vmatprep.subr.bf16.mxu0 %v319
  %400 = vmatpush1.bf16.msra.mxu0 %v318
  %401 = vmatprep.subr.bf16.mxu0 %v321
  %402 = vmatpush1.bf16.msra.mxu0 %v320
  %403 = vmatprep.subr.bf16.mxu0 %v323
  %404 = vmatpush1.bf16.msra.mxu0 %v322
  %405 = vmatprep.subr.bf16.mxu0 %v325
  %406 = vmatpush1.bf16.msra.mxu0 %v324
  %407 = vmatprep.subr.bf16.mxu0 %v327
  %408 = vmatpush1.bf16.msra.mxu0 %v326
  %409 = vmatprep.subr.bf16.mxu0 %v329
  %410 = vmatpush1.bf16.msra.mxu0 %v328
  %411 = vmatprep.subr.bf16.mxu0 %v331
  %412 = vmatpush1.bf16.msra.mxu0 %v330
  %413 = vmatprep.subr.bf16.mxu0 %v333
  %414 = vmatpush1.bf16.msra.mxu0 %v332
  %415 = vmatprep.mubr.bf16.mxu0 %v382
  %416 = vmatmul.mubr.bf16.gmra.mrb[0].mxu0 %v381
  %v417 = vpop.f32.mrb[0].mxu0
  %v418 = vadd.f32 0.0, %v417
  %v419 = vpop.f32.mrb[0].mxu0
  %v420 = vadd.f32 0.0, %v419
  %v421 = vpop.f32.mrb[0].mxu0
  %v422 = vpop.f32.mrb[0].mxu0
  %423 = vdwg.mxu0
  %v424 = vmul.f32 %v418, %v169
  %v425 = vmul.f32 %v420, %v170
  %v426 = vadd.f32 %v424, %v282
  %v427 = vadd.f32 %v425, %v284
  %429 = vset.pattern.permute.xlu0 0
  %430 = vperm.xlu0 %429, %v56
  %v431 = vpop.permute.xlu0 %430
  %v433 = vadd.f32 %v426, %v431
  %v434 = vadd.f32 %v427, %v431
  %435 = vst [vmem:[%s5] sm:$0xff] %v433
  %436 = vst [vmem:[%s5 + $0x8] sm:$0xff] %v434
  %v437 = vld [vmem:[%s0 + $0x10] sm:$0xff]
  %v438 = vld [vmem:[%s0 + $0x18] sm:$0xff]
  %v439 = vld [vmem:[%s0 + $0x30] sm:$0xff]
  %v440 = vld [vmem:[%s0 + $0x38] sm:$0xff]
  %s441 = scalar_lea.vmem %s1, 8
  %v442 = vld [vmem:[%s441] ss:$4 sm:$0x3]
  %v444 = vlaneseq
  %v445 = vshrl.u32 %v444, 7
  %v446 = vsub.s32 0, %v445
  %v447 = vrot.slane %v442, %v446
  %v448 = vlaneseq
  %v449 = vshrl.u32 %v448, 7
  %v450 = vsub.s32 1, %v449
  %v451 = vrot.slane %v442, %v450
  %v454 = vsub.f32 %v437, %v447
  %v455 = vsub.f32 %v438, %v451
  %v456 = vsub.f32 %v439, %v447
  %v457 = vsub.f32 %v440, %v451
  %v458 = vmul.f32 %v454, %v454
  %v459 = vmul.f32 %v455, %v455
  %v460 = vmul.f32 %v456, %v456
  %v461 = vmul.f32 %v457, %v457
  %v462 = vld [vmem:[%s0 + $0x50] sm:$0xff]
  %v463 = vld [vmem:[%s0 + $0x58] sm:$0xff]
  %v464 = vld [vmem:[%s0 + $0x70] sm:$0xff]
  %v465 = vld [vmem:[%s0 + $0x78] sm:$0xff]
  %s466 = scalar_lea.vmem %s1, 9
  %v467 = vld [vmem:[%s466] ss:$4 sm:$0x3]
  %v469 = vlaneseq
  %v470 = vshrl.u32 %v469, 7
  %v471 = vsub.s32 0, %v470
  %v472 = vrot.slane %v467, %v471
  %v473 = vlaneseq
  %v474 = vshrl.u32 %v473, 7
  %v475 = vsub.s32 1, %v474
  %v476 = vrot.slane %v467, %v475
  %v479 = vsub.f32 %v462, %v472
  %v480 = vsub.f32 %v463, %v476
  %v481 = vsub.f32 %v464, %v472
  %v482 = vsub.f32 %v465, %v476
  %v483 = vmul.f32 %v479, %v479
  %v484 = vmul.f32 %v480, %v480
  %v485 = vmul.f32 %v481, %v481
  %v486 = vmul.f32 %v482, %v482
  %v487 = vadd.f32 %v458, %v483
  %v488 = vadd.f32 %v459, %v484
  %v489 = vadd.f32 %v460, %v485
  %v490 = vadd.f32 %v461, %v486
  %v491 = vld [vmem:[%s0 + $0x90] sm:$0xff]
  %v492 = vld [vmem:[%s0 + $0x98] sm:$0xff]
  %v493 = vld [vmem:[%s0 + $0xb0] sm:$0xff]
  %v494 = vld [vmem:[%s0 + $0xb8] sm:$0xff]
  %s495 = scalar_lea.vmem %s1, 10
  %v496 = vld [vmem:[%s495] ss:$4 sm:$0x3]
  %v498 = vlaneseq
  %v499 = vshrl.u32 %v498, 7
  %v500 = vsub.s32 0, %v499
  %v501 = vrot.slane %v496, %v500
  %v502 = vlaneseq
  %v503 = vshrl.u32 %v502, 7
  %v504 = vsub.s32 1, %v503
  %v505 = vrot.slane %v496, %v504
  %v508 = vsub.f32 %v491, %v501
  %v509 = vsub.f32 %v492, %v505
  %v510 = vsub.f32 %v493, %v501
  %v511 = vsub.f32 %v494, %v505
  %v512 = vmul.f32 %v508, %v508
  %v513 = vmul.f32 %v509, %v509
  %v514 = vmul.f32 %v510, %v510
  %v515 = vmul.f32 %v511, %v511
  %v516 = vadd.f32 %v487, %v512
  %v517 = vadd.f32 %v488, %v513
  %v518 = vadd.f32 %v489, %v514
  %v519 = vadd.f32 %v490, %v515
  %v520 = vsub.f32 0.0, %v516
  %v521 = vsub.f32 0.0, %v517
  %v522 = vsub.f32 0.0, %v518
  %v523 = vsub.f32 0.0, %v519
  %v524 = vmul.f32 %v520, 0.5
  %v525 = vmul.f32 %v521, 0.5
  %v526 = vmul.f32 %v522, 0.5
  %v527 = vmul.f32 %v523, 0.5
  %v528 = vmul.f32 %v524, 1.442695
  %v529 = vpow.pop %v528
  %v530 = vmul.f32 %v525, 1.442695
  %v531 = vpow.pop %v530
  %v532 = vmul.f32 %v526, 1.442695
  %v533 = vpow.pop %v532
  %v534 = vmul.f32 %v527, 1.442695
  %v535 = vpow.pop %v534
  %v536 = vadd.f32 %v529, %v533
  %v537 = vrot.slane %v536, 4
  %v538 = vadd.f32 %v536, %v537
  %v539 = vrot.slane %v538, 2
  %v540 = vadd.f32 %v538, %v539
  %v541 = vrot.slane %v540, 1
  %v542 = vadd.f32 %v540, %v541
  %v543 = vadd.f32 %v531, %v535
  %v544 = vrot.slane %v543, 4
  %v545 = vadd.f32 %v543, %v544
  %v546 = vrot.slane %v545, 2
  %v547 = vadd.f32 %v545, %v546
  %v548 = vrot.slane %v547, 1
  %v549 = vadd.f32 %v547, %v548
  %v550 = vrsqrt.pop %v542
  %v551 = vrsqrt.pop %v549
  %v552 = vpack.c.bf16 %v533, %v529
  %v553 = vpack.c.bf16 %v535, %v531
  %554 = vst.msk [vmem:[#allocation2] sm:$0xff] %vm173, %v552
  %555 = vst.msk [vmem:[#allocation2 + $0x10] sm:$0xff] %vm175, %v552
  %556 = vst.msk [vmem:[#allocation2 + $0x20] sm:$0xff] %vm177, %v552
  %557 = vst.msk [vmem:[#allocation2 + $0x30] sm:$0xff] %vm179, %v552
  %558 = vst.msk [vmem:[#allocation2 + $0x40] sm:$0xff] %vm181, %v552
  %559 = vst.msk [vmem:[#allocation2 + $0x50] sm:$0xff] %vm183, %v552
  %560 = vst.msk [vmem:[#allocation2 + $0x60] sm:$0xff] %vm185, %v552
  %561 = vst.msk [vmem:[#allocation2 + $0x70] sm:$0xff] %vm187, %v552
  %562 = vst.msk [vmem:[#allocation2 + $0x88] sm:$0xff] %vm173, %v553
  %563 = vst.msk [vmem:[#allocation2 + $0x98] sm:$0xff] %vm175, %v553
  %564 = vst.msk [vmem:[#allocation2 + $0xa8] sm:$0xff] %vm177, %v553
  %565 = vst.msk [vmem:[#allocation2 + $0xb8] sm:$0xff] %vm179, %v553
  %566 = vst.msk [vmem:[#allocation2 + $0xc8] sm:$0xff] %vm181, %v553
  %567 = vst.msk [vmem:[#allocation2 + $0xd8] sm:$0xff] %vm183, %v553
  %568 = vst.msk [vmem:[#allocation2 + $0xe8] sm:$0xff] %vm185, %v553
  %569 = vst.msk [vmem:[#allocation2 + $0xf8] sm:$0xff] %vm187, %v553
  %v570 = vld [vmem:[%s2 + $0x8] sm:$0xff]
  %v572 = vcombine.high %v570, %v570
  %v573 = vsel %vm210, %v570, 0
  %v575 = vsel %vm210, %v572, 0
  %577 = vmatprep.subr.mxu0 %v575
  %578 = vmatpush1.msra.mxu0 %v573
  %579 = vmatprep.subr.mxu0 0.0
  %580 = vmatpush1.msra.mxu0 0.0
  %581 = vmatprep.subr.mxu0 0.0
  %582 = vmatpush1.msra.mxu0 0.0
  %583 = vmatprep.subr.mxu0 0.0
  %584 = vmatpush1.msra.mxu0 0.0
  %585 = vmatprep.subr.mxu0 0.0
  %586 = vmatpush1.msra.mxu0 0.0
  %587 = vmatprep.subr.mxu0 0.0
  %588 = vmatpush1.msra.mxu0 0.0
  %589 = vmatprep.subr.mxu0 0.0
  %590 = vmatpush1.msra.mxu0 0.0
  %591 = vmatprep.subr.mxu0 0.0
  %592 = vmatpush1.msra.mxu0 0.0
  %593 = vmatprep.subr.mxu0 0.0
  %594 = vmatpush1.msra.mxu0 0.0
  %595 = vmatprep.subr.mxu0 0.0
  %596 = vmatpush1.msra.mxu0 0.0
  %597 = vmatprep.subr.mxu0 0.0
  %598 = vmatpush1.msra.mxu0 0.0
  %599 = vmatprep.subr.mxu0 0.0
  %600 = vmatpush1.msra.mxu0 0.0
  %601 = vmatprep.subr.mxu0 0.0
  %602 = vmatpush1.msra.mxu0 0.0
  %603 = vmatprep.subr.mxu0 0.0
  %604 = vmatpush1.msra.mxu0 0.0
  %605 = vmatprep.subr.mxu0 0.0
  %606 = vmatpush1.msra.mxu0 0.0
  %607 = vmatprep.subr.mxu0 0.0
  %608 = vmatpush1.msra.mxu0 0.0
  %609 = vmatprep.subr.mxu0 0.0
  %610 = vmatpush1.msra.mxu0 0.0
  %611 = vmatprep.subr.mxu0 0.0
  %612 = vmatpush1.msra.mxu0 0.0
  %613 = vmatprep.subr.mxu0 0.0
  %614 = vmatpush1.msra.mxu0 0.0
  %615 = vmatprep.subr.mxu0 0.0
  %616 = vmatpush1.msra.mxu0 0.0
  %617 = vmatprep.subr.mxu0 0.0
  %618 = vmatpush1.msra.mxu0 0.0
  %619 = vmatprep.subr.mxu0 0.0
  %620 = vmatpush1.msra.mxu0 0.0
  %621 = vmatprep.subr.mxu0 0.0
  %622 = vmatpush1.msra.mxu0 0.0
  %623 = vmatprep.subr.mxu0 0.0
  %624 = vmatpush1.msra.mxu0 0.0
  %625 = vmatprep.subr.mxu0 0.0
  %626 = vmatpush1.msra.mxu0 0.0
  %627 = vmatprep.subr.mxu0 0.0
  %628 = vmatpush1.msra.mxu0 0.0
  %629 = vmatprep.subr.mxu0 0.0
  %630 = vmatpush1.msra.mxu0 0.0
  %631 = vmatprep.subr.mxu0 0.0
  %632 = vmatpush1.msra.mxu0 0.0
  %633 = vmatprep.subr.mxu0 0.0
  %634 = vmatpush1.msra.mxu0 0.0
  %635 = vmatprep.subr.mxu0 0.0
  %636 = vmatpush1.msra.mxu0 0.0
  %637 = vmatprep.subr.mxu0 0.0
  %638 = vmatpush1.msra.mxu0 0.0
  %639 = vmatprep.subr.mxu0 0.0
  %640 = vmatpush1.msra.mxu0 0.0
  %641 = vmatprep.mubr.f32.mxu0 0.0
  %642 = vmatmul.mubr.f32.gmra.mrb[0].mxu0 %v202
  %v643 = vpop.f32.mrb[0].mxu0
  %v644 = vadd.f32 0.0, %v643
  %v645 = vpop.f32.mrb[0].mxu0
  %v646 = vadd.f32 0.0, %v645
  %647 = vmatprep.mubr.f32.mxu0 0.0
  %648 = vmatmul.mubr.f32.gmra.mrb[0].mxu0 %v205
  %v649 = vpop.f32.mrb[0].mxu0
  %v650 = vadd.f32 0.0, %v649
  %v651 = vpop.f32.mrb[0].mxu0
  %v652 = vadd.f32 0.0, %v651
  %653 = vmatprep.mubr.f32.mxu0 0.0
  %654 = vmatmul.mubr.f32.gmra.mrb[0].mxu0 %v208
  %v655 = vpop.f32.mrb[0].mxu0
  %v656 = vadd.f32 0.0, %v655
  %v657 = vpop.f32.mrb[0].mxu0
  %v658 = vadd.f32 0.0, %v657
  %659 = vdwg.mxu0
  %v660 = vmul.f32 %v656, %v550
  %v661 = vmul.f32 %v658, %v551
  %v662 = vpack.c.bf16 %v660, %v660
  %v663 = vpack.c.bf16 %v661, %v661
  %v664 = vld [vmem:[#allocation2] sm:$0xff]
  %v665 = vld [vmem:[#allocation2 + $0x8] sm:$0xff]
  %v666 = vld [vmem:[#allocation2 + $0x10] sm:$0xff]
  %v667 = vld [vmem:[#allocation2 + $0x18] sm:$0xff]
  %v668 = vld [vmem:[#allocation2 + $0x20] sm:$0xff]
  %v669 = vld [vmem:[#allocation2 + $0x28] sm:$0xff]
  %v670 = vld [vmem:[#allocation2 + $0x30] sm:$0xff]
  %v671 = vld [vmem:[#allocation2 + $0x38] sm:$0xff]
  %v672 = vld [vmem:[#allocation2 + $0x40] sm:$0xff]
  %v673 = vld [vmem:[#allocation2 + $0x48] sm:$0xff]
  %v674 = vld [vmem:[#allocation2 + $0x50] sm:$0xff]
  %v675 = vld [vmem:[#allocation2 + $0x58] sm:$0xff]
  %v676 = vld [vmem:[#allocation2 + $0x60] sm:$0xff]
  %v677 = vld [vmem:[#allocation2 + $0x68] sm:$0xff]
  %v678 = vld [vmem:[#allocation2 + $0x70] sm:$0xff]
  %v679 = vld [vmem:[#allocation2 + $0x78] sm:$0xff]
  %v680 = vld [vmem:[#allocation2 + $0x80] sm:$0xff]
  %v681 = vld [vmem:[#allocation2 + $0x88] sm:$0xff]
  %v682 = vld [vmem:[#allocation2 + $0x90] sm:$0xff]
  %v683 = vld [vmem:[#allocation2 + $0x98] sm:$0xff]
  %v684 = vld [vmem:[#allocation2 + $0xa0] sm:$0xff]
  %v685 = vld [vmem:[#allocation2 + $0xa8] sm:$0xff]
  %v686 = vld [vmem:[#allocation2 + $0xb0] sm:$0xff]
  %v687 = vld [vmem:[#allocation2 + $0xb8] sm:$0xff]
  %v688 = vld [vmem:[#allocation2 + $0xc0] sm:$0xff]
  %v689 = vld [vmem:[#allocation2 + $0xc8] sm:$0xff]
  %v690 = vld [vmem:[#allocation2 + $0xd0] sm:$0xff]
  %v691 = vld [vmem:[#allocation2 + $0xd8] sm:$0xff]
  %v692 = vld [vmem:[#allocation2 + $0xe0] sm:$0xff]
  %v693 = vld [vmem:[#allocation2 + $0xe8] sm:$0xff]
  %v694 = vld [vmem:[#allocation2 + $0xf0] sm:$0xff]
  %v695 = vld [vmem:[#allocation2 + $0xf8] sm:$0xff]
  %696 = vmatprep.subr.bf16.mxu0 %v665
  %697 = vmatpush1.bf16.msra.mxu0 %v664
  %698 = vmatprep.subr.bf16.mxu0 %v667
  %699 = vmatpush1.bf16.msra.mxu0 %v666
  %700 = vmatprep.subr.bf16.mxu0 %v669
  %701 = vmatpush1.bf16.msra.mxu0 %v668
  %702 = vmatprep.subr.bf16.mxu0 %v671
  %703 = vmatpush1.bf16.msra.mxu0 %v670
  %704 = vmatprep.subr.bf16.mxu0 %v673
  %705 = vmatpush1.bf16.msra.mxu0 %v672
  %706 = vmatprep.subr.bf16.mxu0 %v675
  %707 = vmatpush1.bf16.msra.mxu0 %v674
  %708 = vmatprep.subr.bf16.mxu0 %v677
  %709 = vmatpush1.bf16.msra.mxu0 %v676
  %710 = vmatprep.subr.bf16.mxu0 %v679
  %711 = vmatpush1.bf16.msra.mxu0 %v678
  %712 = vmatprep.subr.bf16.mxu0 %v681
  %713 = vmatpush1.bf16.msra.mxu0 %v680
  %714 = vmatprep.subr.bf16.mxu0 %v683
  %715 = vmatpush1.bf16.msra.mxu0 %v682
  %716 = vmatprep.subr.bf16.mxu0 %v685
  %717 = vmatpush1.bf16.msra.mxu0 %v684
  %718 = vmatprep.subr.bf16.mxu0 %v687
  %719 = vmatpush1.bf16.msra.mxu0 %v686
  %720 = vmatprep.subr.bf16.mxu0 %v689
  %721 = vmatpush1.bf16.msra.mxu0 %v688
  %722 = vmatprep.subr.bf16.mxu0 %v691
  %723 = vmatpush1.bf16.msra.mxu0 %v690
  %724 = vmatprep.subr.bf16.mxu0 %v693
  %725 = vmatpush1.bf16.msra.mxu0 %v692
  %726 = vmatprep.subr.bf16.mxu0 %v695
  %727 = vmatpush1.bf16.msra.mxu0 %v694
  %728 = vmatprep.mubr.bf16.mxu0 %v663
  %729 = vmatmul.mubr.bf16.gmra.mrb[0].mxu0 %v662
  %v730 = vpop.f32.mrb[0].mxu0
  %v731 = vadd.f32 0.0, %v730
  %v732 = vpop.f32.mrb[0].mxu0
  %v733 = vadd.f32 0.0, %v732
  %v734 = vpop.f32.mrb[0].mxu0
  %v735 = vpop.f32.mrb[0].mxu0
  %736 = vdwg.mxu0
  %v737 = vmul.f32 %v731, %v550
  %v738 = vmul.f32 %v733, %v551
  %v739 = vadd.f32 %v737, %v650
  %v740 = vadd.f32 %v738, %v652
  %v741 = vmul.f32 %v739, %v550
  %v742 = vmul.f32 %v740, %v551
  %v743 = vpack.c.bf16 %v741, %v741
  %v744 = vpack.c.bf16 %v742, %v742
  %745 = vmatprep.subr.bf16.mxu0 %v665
  %746 = vmatpush1.bf16.msra.mxu0 %v664
  %747 = vmatprep.subr.bf16.mxu0 %v667
  %748 = vmatpush1.bf16.msra.mxu0 %v666
  %749 = vmatprep.subr.bf16.mxu0 %v669
  %750 = vmatpush1.bf16.msra.mxu0 %v668
  %751 = vmatprep.subr.bf16.mxu0 %v671
  %752 = vmatpush1.bf16.msra.mxu0 %v670
  %753 = vmatprep.subr.bf16.mxu0 %v673
  %754 = vmatpush1.bf16.msra.mxu0 %v672
  %755 = vmatprep.subr.bf16.mxu0 %v675
  %756 = vmatpush1.bf16.msra.mxu0 %v674
  %757 = vmatprep.subr.bf16.mxu0 %v677
  %758 = vmatpush1.bf16.msra.mxu0 %v676
  %759 = vmatprep.subr.bf16.mxu0 %v679
  %760 = vmatpush1.bf16.msra.mxu0 %v678
  %761 = vmatprep.subr.bf16.mxu0 %v681
  %762 = vmatpush1.bf16.msra.mxu0 %v680
  %763 = vmatprep.subr.bf16.mxu0 %v683
  %764 = vmatpush1.bf16.msra.mxu0 %v682
  %765 = vmatprep.subr.bf16.mxu0 %v685
  %766 = vmatpush1.bf16.msra.mxu0 %v684
  %767 = vmatprep.subr.bf16.mxu0 %v687
  %768 = vmatpush1.bf16.msra.mxu0 %v686
  %769 = vmatprep.subr.bf16.mxu0 %v689
  %770 = vmatpush1.bf16.msra.mxu0 %v688
  %771 = vmatprep.subr.bf16.mxu0 %v691
  %772 = vmatpush1.bf16.msra.mxu0 %v690
  %773 = vmatprep.subr.bf16.mxu0 %v693
  %774 = vmatpush1.bf16.msra.mxu0 %v692
  %775 = vmatprep.subr.bf16.mxu0 %v695
  %776 = vmatpush1.bf16.msra.mxu0 %v694
  %777 = vmatprep.mubr.bf16.mxu0 %v744
  %778 = vmatmul.mubr.bf16.gmra.mrb[0].mxu0 %v743
  %v779 = vpop.f32.mrb[0].mxu0
  %v780 = vadd.f32 0.0, %v779
  %v781 = vpop.f32.mrb[0].mxu0
  %v782 = vadd.f32 0.0, %v781
  %v783 = vpop.f32.mrb[0].mxu0
  %v784 = vpop.f32.mrb[0].mxu0
  %785 = vdwg.mxu0
  %v786 = vmul.f32 %v780, %v550
  %v787 = vmul.f32 %v782, %v551
  %v788 = vadd.f32 %v786, %v644
  %v789 = vadd.f32 %v787, %v646
  %v790 = vadd.f32 %v788, %v431
  %v791 = vadd.f32 %v789, %v431
  %792 = vst [vmem:[%s5 + $0x10] sm:$0xff] %v790
  %793 = vst [vmem:[%s5 + $0x18] sm:$0xff] %v791
  // Predicated region
  $region22: #{kernel_graph_filter.1} parent=0 // pred_check
    _
  $region23: #{kernel_graph_filter.1} parent=0 // pred_check_branch
    %795 = sbr.rel (0) target = $region25
  $region24: #{kernel_graph_filter.1} parent=0 // pred_region
    _
  $region25: #{kernel_graph_filter.1} parent=0 // pred_fallthru
    _
  // Predicated region
  $region26: #{kernel_graph_filter.1} parent=0 // pred_check
    _
  $region27: #{kernel_graph_filter.1} parent=0 // pred_check_branch
    %797 = sbr.rel (0) target = $region29
  $region28: #{kernel_graph_filter.1} parent=0 // pred_region
    _
  $region29: #{kernel_graph_filter.1} parent=0 // pred_fallthru
    _

</llo_original>
